<compile_context>
chip_gen: v7x
topology: tpu7x:2x2x1
jax: 0.10.0
libtpu: 0.0.40
codegen_flags: <defaults>
</compile_context>

<pallas_src>
import functools

import jax
import jax.numpy as jnp
from jax.experimental import pallas as pl
from jax.experimental.pallas import tpu as pltpu


LN_EPS = 1e-5  # matches torch.nn.LayerNorm default


def _round_up(x, m):
    return ((x + m - 1) // m) * m


# ---------------------------------------------------------------------------
# Per-generation tiling / VMEM budget.
# ---------------------------------------------------------------------------
def _vmem_capacity_bytes():
    try:
        return int(pltpu.get_tpu_info().vmem_capacity_bytes)
    except Exception:
        return 64 * 1024 * 1024  # conservative fallback (v7x per-TC VMEM)


_VMEM_CAP = _vmem_capacity_bytes()
if _VMEM_CAP <= 64 * 1024 * 1024:
    # v7x: 64 MiB per TensorCore -> smaller tiles, tighter scoped limit.
    _TM_TARGET = 256
    _VMEM_LIMIT_BYTES = 40 * 1024 * 1024
else:
    # v5e / v6e: 128 MiB -> bigger tiles amortize per-step pipeline overhead.
    _TM_TARGET = 1024
    _VMEM_LIMIT_BYTES = 96 * 1024 * 1024

# Flipped to False at runtime if pl.Buffered(1) is rejected by this jax build.
_SINGLE_BUFFER_OK = True


def _choose_tm(m_rows):
    """Row-tile size: multiple of 8, <= per-generation target, and small
    enough that the 'parallel' grid axis has >= 4 steps (v7x megacore)."""
    tm = _round_up(max(1, (m_rows + 3) // 4), 8)
    return max(8, min(_TM_TARGET, tm))


# ---------------------------------------------------------------------------
# Kernel
# ---------------------------------------------------------------------------
def _fusion_kernel(hs_ref, gnn_ref, wg_hs_ref, wg_gnn_ref, wt_ref, vec_ref,
                   out_ref, *, inv_h):
    """Gated Transformer/GNN fusion + LayerNorm on one (TM, Hp) row tile.

    hs_ref, gnn_ref : [TM, Hp]  activation tiles (native / compute dtype)
    wg_hs_ref       : [Hp, Hp]  gate weight acting on the hidden_states half
    wg_gnn_ref      : [Hp, Hp]  gate weight acting on the gnn_output half
    wt_ref          : [Hp, Hp]  transform of gnn_output
    vec_ref         : [8, Hp]   rows 0..3 = bg, bt, gamma, beta (rest zero)
    out_ref         : [TM, Hp]
    inv_h           : python float, 1 / H_true (padded columns are exact zeros)
    """
    hs = hs_ref[...]
    gnn = gnn_ref[...]

    vecs = vec_ref[...].astype(jnp.float32)
    bg, bt = vecs[0:1, :], vecs[1:2, :]
    gamma, beta = vecs[2:3, :], vecs[3:4, :]

    # gate = sigmoid([hs, gnn] @ Wg + bg) — split matmul avoids materializing
    # the concat; MXU consumes native-dtype operands, accumulates in f32.
    gate = jax.nn.sigmoid(
        jnp.dot(hs, wg_hs_ref[...], preferred_element_type=jnp.float32)
        + jnp.dot(gnn, wg_gnn_ref[...], preferred_element_type=jnp.float32)
        + bg)

    # transformed = gnn @ Wt + bt
    transformed = (
        jnp.dot(gnn, wt_ref[...], preferred_element_type=jnp.float32) + bt)

    # gated residual combination, rewritten to drop one (TM, Hp) temporary:
    #   gate*t + (1-gate)*hs == hs + gate*(t - hs)
    hs_f32 = hs.astype(jnp.float32)
    fused = hs_f32 + gate * (transformed - hs_f32)

    # One-pass LayerNorm over the true hidden dim.  Padded columns of `fused`
    # are exactly zero (zero-padded inputs/weights/biases), so plain sums
    # divided by H_true give correct statistics.
    mean = jnp.sum(fused, axis=-1, keepdims=True) * inv_h
    mean_sq = jnp.sum(fused * fused, axis=-1, keepdims=True) * inv_h
    var = mean_sq - mean * mean
    scale = jax.lax.rsqrt(var + LN_EPS) * gamma        # fold gamma into scale
    out_ref[...] = ((fused - mean) * scale + beta).astype(out_ref.dtype)


@functools.partial(jax.jit,
                   static_argnames=("tm", "h_true", "single_buffer_weights"))
def _fused_forward(hs2d, gnn2d, wg_hs, wg_gnn, wt, vec, *,
                   tm, h_true, single_buffer_weights):
    M, Hp = hs2d.shape

    act_spec = pl.BlockSpec((tm, Hp), lambda i: (i, 0))
    if single_buffer_weights:
        # Grid-invariant blocks: no point double-buffering them.
        w_spec = pl.BlockSpec((Hp, Hp), lambda i: (0, 0),
                              pipeline_mode=pl.Buffered(1))
        vec_spec = pl.BlockSpec((8, Hp), lambda i: (0, 0),
                                pipeline_mode=pl.Buffered(1))
    else:
        w_spec = pl.BlockSpec((Hp, Hp), lambda i: (0, 0))
        vec_spec = pl.BlockSpec((8, Hp), lambda i: (0, 0))

    kernel = functools.partial(_fusion_kernel, inv_h=1.0 / float(h_true))

    # TODO(synk): for very large H (3*Hp^2*weight_bytes approaching the VMEM
    # budget) tile the weight output-column dim with a second grid axis and
    # defer the LayerNorm to a second pass.
    return pl.pallas_call(
        kernel,
        out_shape=jax.ShapeDtypeStruct((M, Hp), hs2d.dtype),
        grid=(pl.cdiv(M, tm),),
        in_specs=[
            act_spec,    # hidden_states tile
            act_spec,    # gnn_output tile
            w_spec,      # Wg (hs half)
            w_spec,      # Wg (gnn half)
            w_spec,      # Wt
            vec_spec,    # stacked bg / bt / gamma / beta
        ],
        out_specs=act_spec,
        compiler_params=pltpu.CompilerParams(
            dimension_semantics=("parallel",),
            vmem_limit_bytes=_VMEM_LIMIT_BYTES,
        ),
    )(hs2d, gnn2d, wg_hs, wg_gnn, wt, vec)


# ---------------------------------------------------------------------------
# Parameter preparation (done once, outside the hot path)
# ---------------------------------------------------------------------------
def prepare_params(params, hidden_size, compute_dtype=None):
    """Pad params to a lane-dense hidden dim and cast once.

    Layout is input-major (y = x @ W).  When importing real PyTorch nn.Linear
    weights ([out, in]) transpose them first.  Pass compute_dtype=jnp.bfloat16
    for the production bf16 MXU path.
    """
    H = hidden_size
    Hp = _round_up(H, 128)
    if compute_dtype is None:
        compute_dtype = params["wt"].dtype

    def pad_w(w):                                   # [H, H] -> [Hp, Hp]
        w = w.astype(compute_dtype)
        return jnp.pad(w, ((0, Hp - H), (0, Hp - H))) if Hp != H else w

    def row(v):                                     # [1, H] -> [1, Hp]
        v = v.reshape(1, H).astype(compute_dtype)
        return jnp.pad(v, ((0, 0), (0, Hp - H))) if Hp != H else v

    vec = jnp.concatenate(
        [row(params["bg"]), row(params["bt"]),
         row(params["gamma"]), row(params["beta"]),
         jnp.zeros((4, Hp), compute_dtype)], axis=0)      # (8, Hp)

    return {
        "h": H,
        "hp": Hp,
        "dtype": jnp.dtype(compute_dtype),
        "wg_hs": pad_w(params["wg_hs"]),
        "wg_gnn": pad_w(params["wg_gnn"]),
        "wt": pad_w(params["wt"]),
        "vec": vec,
    }


def transformer_gnn_integration(hidden_states, gnn_output, prepared,
                                attention_mask=None):
    """hidden_states, gnn_output: [B, S, H].  Returns [B, S, H]."""
    global _SINGLE_BUFFER_OK
    del attention_mask  # TODO(synk): mask is accepted but unused in the reference fusion path
    B, S, H = hidden_states.shape
    Hp = prepared["hp"]
    dtype = prepared["dtype"]
    M = B * S

    hs2d = hidden_states.reshape(M, H).astype(dtype)
    gnn2d = gnn_output.reshape(M, H).astype(dtype)
    if Hp != H:
        # Lane-dense hidden dim (skipped entirely when H % 128 == 0); rows are
        # NOT padded — Pallas handles the partial final row-block.
        hs2d = jnp.pad(hs2d, ((0, 0), (0, Hp - H)))
        gnn2d = jnp.pad(gnn2d, ((0, 0), (0, Hp - H)))

    tm = _choose_tm(M)
    args = (hs2d, gnn2d, prepared["wg_hs"], prepared["wg_gnn"],
            prepared["wt"], prepared["vec"])

    out2d = None
    if _SINGLE_BUFFER_OK:
        try:
            out2d = _fused_forward(*args, tm=tm, h_true=H,
                                   single_buffer_weights=True)
        except Exception:
            # pl.Buffered(1) not supported on this jax build; use default 2-deep.
            _SINGLE_BUFFER_OK = False
    if out2d is None:
        out2d = _fused_forward(*args, tm=tm, h_true=H,
                               single_buffer_weights=False)

    return out2d[:, :H].reshape(B, S, H).astype(hidden_states.dtype)


def init_params(key, hidden_size):
    """Deterministic synthetic parameters (shapes match the nn.Module init).

    Stored input-major (x @ W); a torch nn.Linear import needs a transpose.
    """
    k1, k2, k3 = jax.random.split(key, 3)
    scale_gate = 1.0 / jnp.sqrt(2.0 * hidden_size)
    scale_tr = 1.0 / jnp.sqrt(float(hidden_size))
    wg = jax.random.normal(k1, (2 * hidden_size, hidden_size), jnp.float32) * scale_gate
    wt = jax.random.normal(k2, (hidden_size, hidden_size), jnp.float32) * scale_tr
    bg = jax.random.normal(k3, (1, hidden_size), jnp.float32) * 0.01
    return {
        "wg_hs": wg[:hidden_size],
        "wg_gnn": wg[hidden_size:],
        "bg": bg,
        "wt": wt,
        "bt": jnp.zeros((1, hidden_size), jnp.float32),
        "gamma": jnp.ones((1, hidden_size), jnp.float32),
        "beta": jnp.zeros((1, hidden_size), jnp.float32),
    }


if __name__ == "__main__":
    B, S, H = 2, 8, 32  # batch, seq, hidden_size

    key = jax.random.PRNGKey(0)
    k_hs, k_gnn, k_params = jax.random.split(key, 3)

    hidden_states = jax.random.normal(k_hs, (B, S, H), jnp.float32)
    gnn_output = jax.random.normal(k_gnn, (B, S, H), jnp.float32)
    params = init_params(k_params, H)

    # Pad + cast params once, outside the hot path.
    prepared = prepare_params(params, H, compute_dtype=hidden_states.dtype)

    out = transformer_gnn_integration(hidden_states, gnn_output, prepared)
    jax.block_until_ready(out)

    # lightweight sanity check against a pure-JAX reference
    def ref(hs, gnn, p):
        gate = jax.nn.sigmoid(hs @ p["wg_hs"] + gnn @ p["wg_gnn"] + p["bg"])
        tr = gnn @ p["wt"] + p["bt"]
        fused = gate * tr + (1.0 - gate) * hs
        mu = fused.mean(-1, keepdims=True)
        var = ((fused - mu) ** 2).mean(-1, keepdims=True)
        return (fused - mu) * jax.lax.rsqrt(var + LN_EPS) * p["gamma"] + p["beta"]

    expected = ref(hidden_states, gnn_output, params)
    assert jnp.allclose(out, expected, atol=2e-4, rtol=2e-4), (
        float(jnp.max(jnp.abs(out - expected))))

    print("KERNEL_OK")
</pallas_src>

<mosaic_0001>
module attributes {stable_mosaic.version = 11 : i64} {
  func.func @_fusion_kernel(%arg0: i32, %arg1: memref<8x128xf32, #tpu.memory_space<vmem>>, %arg2: memref<8x128xf32, #tpu.memory_space<vmem>>, %arg3: memref<128x128xf32, #tpu.memory_space<vmem>>, %arg4: memref<128x128xf32, #tpu.memory_space<vmem>>, %arg5: memref<128x128xf32, #tpu.memory_space<vmem>>, %arg6: memref<8x128xf32, #tpu.memory_space<vmem>>, %arg7: memref<8x128xf32, #tpu.memory_space<vmem>>) attributes {dimension_semantics = [#tpu.dimension_semantics<parallel>], iteration_bounds = array<i64: 2>, scalar_prefetch = 0 : i64, scratch_operands = 0 : i64, tpu.core_type = #tpu.core_type<tc>, window_params = [{transform_indices = @transform_0, window_bounds = array<i64: 8, 128>}, {transform_indices = @transform_1, window_bounds = array<i64: 8, 128>}, {pipeline_mode = #tpu.pipeline_mode<synchronous>, transform_indices = @transform_2, window_bounds = array<i64: 128, 128>}, {pipeline_mode = #tpu.pipeline_mode<synchronous>, transform_indices = @transform_3, window_bounds = array<i64: 128, 128>}, {pipeline_mode = #tpu.pipeline_mode<synchronous>, transform_indices = @transform_4, window_bounds = array<i64: 128, 128>}, {pipeline_mode = #tpu.pipeline_mode<synchronous>, transform_indices = @transform_5, window_bounds = array<i64: 8, 128>}, {transform_indices = @transform_6, window_bounds = array<i64: 8, 128>}]} {
    %c0 = arith.constant 0 : index
    %c0_0 = arith.constant 0 : index
    %0 = vector.load %arg1[%c0, %c0_0] : memref<8x128xf32, #tpu.memory_space<vmem>>, vector<8x128xf32>
    %c0_1 = arith.constant 0 : index
    %c0_2 = arith.constant 0 : index
    %1 = vector.load %arg2[%c0_1, %c0_2] : memref<8x128xf32, #tpu.memory_space<vmem>>, vector<8x128xf32>
    %c0_3 = arith.constant 0 : index
    %c0_4 = arith.constant 0 : index
    %2 = vector.load %arg6[%c0_3, %c0_4] : memref<8x128xf32, #tpu.memory_space<vmem>>, vector<8x128xf32>
    %3 = vector.extract_strided_slice %2 {offsets = [0, 0], sizes = [1, 128], strides = [1, 1]} : vector<8x128xf32> to vector<1x128xf32>
    %4 = vector.extract_strided_slice %2 {offsets = [1, 0], sizes = [1, 128], strides = [1, 1]} : vector<8x128xf32> to vector<1x128xf32>
    %5 = vector.extract_strided_slice %2 {offsets = [2, 0], sizes = [1, 128], strides = [1, 1]} : vector<8x128xf32> to vector<1x128xf32>
    %6 = vector.extract_strided_slice %2 {offsets = [3, 0], sizes = [1, 128], strides = [1, 1]} : vector<8x128xf32> to vector<1x128xf32>
    %c0_5 = arith.constant 0 : index
    %c0_6 = arith.constant 0 : index
    %7 = vector.load %arg3[%c0_5, %c0_6] : memref<128x128xf32, #tpu.memory_space<vmem>>, vector<128x128xf32>
    %cst = arith.constant dense<0.000000e+00> : vector<8x128xf32>
    %8 = tpu.matmul %0, %7, %cst {dimension_numbers = #tpu.dot_dimension_numbers<[1], [0], [0], [1], [0, 0, 1, 1], [], []>} : vector<8x128xf32>, vector<128x128xf32>, vector<8x128xf32> -> vector<8x128xf32>
    %c0_7 = arith.constant 0 : index
    %c0_8 = arith.constant 0 : index
    %9 = vector.load %arg4[%c0_7, %c0_8] : memref<128x128xf32, #tpu.memory_space<vmem>>, vector<128x128xf32>
    %cst_9 = arith.constant dense<0.000000e+00> : vector<8x128xf32>
    %10 = tpu.matmul %1, %9, %cst_9 {dimension_numbers = #tpu.dot_dimension_numbers<[1], [0], [0], [1], [0, 0, 1, 1], [], []>} : vector<8x128xf32>, vector<128x128xf32>, vector<8x128xf32> -> vector<8x128xf32>
    %11 = arith.addf %8, %10 : vector<8x128xf32>
    %12 = vector.broadcast %3 : vector<1x128xf32> to vector<8x128xf32>
    %13 = arith.addf %11, %12 : vector<8x128xf32>
    %14 = arith.negf %13 : vector<8x128xf32>
    %15 = math.exp %14 : vector<8x128xf32>
    %cst_10 = arith.constant 1.000000e+00 : f32
    %16 = vector.broadcast %cst_10 : f32 to vector<8x128xf32>
    %17 = arith.addf %16, %15 : vector<8x128xf32>
    %18 = arith.divf %16, %17 : vector<8x128xf32>
    %c0_11 = arith.constant 0 : index
    %c0_12 = arith.constant 0 : index
    %19 = vector.load %arg5[%c0_11, %c0_12] : memref<128x128xf32, #tpu.memory_space<vmem>>, vector<128x128xf32>
    %cst_13 = arith.constant dense<0.000000e+00> : vector<8x128xf32>
    %20 = tpu.matmul %1, %19, %cst_13 {dimension_numbers = #tpu.dot_dimension_numbers<[1], [0], [0], [1], [0, 0, 1, 1], [], []>} : vector<8x128xf32>, vector<128x128xf32>, vector<8x128xf32> -> vector<8x128xf32>
    %21 = vector.broadcast %4 : vector<1x128xf32> to vector<8x128xf32>
    %22 = arith.addf %20, %21 : vector<8x128xf32>
    %23 = arith.subf %22, %0 : vector<8x128xf32>
    %24 = arith.mulf %18, %23 : vector<8x128xf32>
    %25 = arith.addf %0, %24 : vector<8x128xf32>
    %cst_14 = arith.constant dense<0.000000e+00> : vector<8xf32>
    %26 = vector.multi_reduction <add>, %25, %cst_14 [1] : vector<8x128xf32> to vector<8xf32>
    %27 = vector.shape_cast %26 : vector<8xf32> to vector<8x1xf32>
    %cst_15 = arith.constant 3.125000e-02 : f32
    %28 = vector.broadcast %cst_15 : f32 to vector<8x1xf32>
    %29 = arith.mulf %27, %28 : vector<8x1xf32>
    %30 = arith.mulf %25, %25 : vector<8x128xf32>
    %cst_16 = arith.constant dense<0.000000e+00> : vector<8xf32>
    %31 = vector.multi_reduction <add>, %30, %cst_16 [1] : vector<8x128xf32> to vector<8xf32>
    %32 = vector.shape_cast %31 : vector<8xf32> to vector<8x1xf32>
    %cst_17 = arith.constant 3.125000e-02 : f32
    %33 = vector.broadcast %cst_17 : f32 to vector<8x1xf32>
    %34 = arith.mulf %32, %33 : vector<8x1xf32>
    %35 = arith.mulf %29, %29 : vector<8x1xf32>
    %36 = arith.subf %34, %35 : vector<8x1xf32>
    %cst_18 = arith.constant 9.99999974E-6 : f32
    %37 = vector.broadcast %cst_18 : f32 to vector<8x1xf32>
    %38 = arith.addf %36, %37 : vector<8x1xf32>
    %39 = math.rsqrt %38 : vector<8x1xf32>
    %40 = vector.broadcast %39 : vector<8x1xf32> to vector<8x128xf32>
    %41 = vector.broadcast %5 : vector<1x128xf32> to vector<8x128xf32>
    %42 = arith.mulf %40, %41 : vector<8x128xf32>
    %43 = vector.broadcast %29 : vector<8x1xf32> to vector<8x128xf32>
    %44 = arith.subf %25, %43 : vector<8x128xf32>
    %45 = arith.mulf %44, %42 : vector<8x128xf32>
    %46 = vector.broadcast %6 : vector<1x128xf32> to vector<8x128xf32>
    %47 = arith.addf %45, %46 : vector<8x128xf32>
    %c0_19 = arith.constant 0 : index
    %c0_20 = arith.constant 0 : index
    %48 = vector.load %arg7[%c0_19, %c0_20] : memref<8x128xf32, #tpu.memory_space<vmem>>, vector<8x128xf32>
    tpu.vector_store %arg7[%c0_19, %c0_20], %47 {strides = array<i32>} : memref<8x128xf32, #tpu.memory_space<vmem>>, vector<8x128xf32>,
    return
  }
  func.func @transform_0(%arg0: i32) -> (i32, i32) {
    %c0_i32 = arith.constant 0 : i32
    %c0_i32_0 = arith.constant 0 : i32
    return %arg0, %c0_i32 : i32, i32
  }
  func.func @transform_1(%arg0: i32) -> (i32, i32) {
    %c0_i32 = arith.constant 0 : i32
    %c0_i32_0 = arith.constant 0 : i32
    return %arg0, %c0_i32 : i32, i32
  }
  func.func @transform_2(%arg0: i32) -> (i32, i32) {
    %c0_i32 = arith.constant 0 : i32
    %c0_i32_0 = arith.constant 0 : i32
    %c0_i32_1 = arith.constant 0 : i32
    return %c0_i32, %c0_i32_0 : i32, i32
  }
  func.func @transform_3(%arg0: i32) -> (i32, i32) {
    %c0_i32 = arith.constant 0 : i32
    %c0_i32_0 = arith.constant 0 : i32
    %c0_i32_1 = arith.constant 0 : i32
    return %c0_i32, %c0_i32_0 : i32, i32
  }
  func.func @transform_4(%arg0: i32) -> (i32, i32) {
    %c0_i32 = arith.constant 0 : i32
    %c0_i32_0 = arith.constant 0 : i32
    %c0_i32_1 = arith.constant 0 : i32
    return %c0_i32, %c0_i32_0 : i32, i32
  }
  func.func @transform_5(%arg0: i32) -> (i32, i32) {
    %c0_i32 = arith.constant 0 : i32
    %c0_i32_0 = arith.constant 0 : i32
    %c0_i32_1 = arith.constant 0 : i32
    return %c0_i32, %c0_i32_0 : i32, i32
  }
  func.func @transform_6(%arg0: i32) -> (i32, i32) {
    %c0_i32 = arith.constant 0 : i32
    %c0_i32_0 = arith.constant 0 : i32
    return %arg0, %c0_i32 : i32, i32
  }
}

module attributes {stable_mosaic.version = 11 : i64} {
  func.func @_fusion_kernel(%arg0: i32, %arg1: memref<8x128xf32, #tpu.memory_space<vmem>>, %arg2: memref<8x128xf32, #tpu.memory_space<vmem>>, %arg3: memref<128x128xf32, #tpu.memory_space<vmem>>, %arg4: memref<128x128xf32, #tpu.memory_space<vmem>>, %arg5: memref<128x128xf32, #tpu.memory_space<vmem>>, %arg6: memref<8x128xf32, #tpu.memory_space<vmem>>, %arg7: memref<8x128xf32, #tpu.memory_space<vmem>>) attributes {dimension_semantics = [#tpu.dimension_semantics<parallel>], iteration_bounds = array<i64: 2>, scalar_prefetch = 0 : i64, scratch_operands = 0 : i64, tpu.core_type = #tpu.core_type<tc>, window_params = [{transform_indices = @transform_0, window_bounds = array<i64: 8, 128>}, {transform_indices = @transform_1, window_bounds = array<i64: 8, 128>}, {pipeline_mode = #tpu.pipeline_mode<synchronous>, transform_indices = @transform_2, window_bounds = array<i64: 128, 128>}, {pipeline_mode = #tpu.pipeline_mode<synchronous>, transform_indices = @transform_3, window_bounds = array<i64: 128, 128>}, {pipeline_mode = #tpu.pipeline_mode<synchronous>, transform_indices = @transform_4, window_bounds = array<i64: 128, 128>}, {pipeline_mode = #tpu.pipeline_mode<synchronous>, transform_indices = @transform_5, window_bounds = array<i64: 8, 128>}, {transform_indices = @transform_6, window_bounds = array<i64: 8, 128>}]} {
    %c0 = arith.constant 0 : index
    %c0_0 = arith.constant 0 : index
    %0 = vector.load %arg1[%c0, %c0_0] : memref<8x128xf32, #tpu.memory_space<vmem>>, vector<8x128xf32>
    %c0_1 = arith.constant 0 : index
    %c0_2 = arith.constant 0 : index
    %1 = vector.load %arg2[%c0_1, %c0_2] : memref<8x128xf32, #tpu.memory_space<vmem>>, vector<8x128xf32>
    %c0_3 = arith.constant 0 : index
    %c0_4 = arith.constant 0 : index
    %2 = vector.load %arg6[%c0_3, %c0_4] : memref<8x128xf32, #tpu.memory_space<vmem>>, vector<8x128xf32>
    %3 = vector.extract_strided_slice %2 {offsets = [0, 0], sizes = [1, 128], strides = [1, 1]} : vector<8x128xf32> to vector<1x128xf32>
    %4 = vector.extract_strided_slice %2 {offsets = [1, 0], sizes = [1, 128], strides = [1, 1]} : vector<8x128xf32> to vector<1x128xf32>
    %5 = vector.extract_strided_slice %2 {offsets = [2, 0], sizes = [1, 128], strides = [1, 1]} : vector<8x128xf32> to vector<1x128xf32>
    %6 = vector.extract_strided_slice %2 {offsets = [3, 0], sizes = [1, 128], strides = [1, 1]} : vector<8x128xf32> to vector<1x128xf32>
    %c0_5 = arith.constant 0 : index
    %c0_6 = arith.constant 0 : index
    %7 = vector.load %arg3[%c0_5, %c0_6] : memref<128x128xf32, #tpu.memory_space<vmem>>, vector<128x128xf32>
    %cst = arith.constant dense<0.000000e+00> : vector<8x128xf32>
    %8 = tpu.matmul %0, %7, %cst {dimension_numbers = #tpu.dot_dimension_numbers<[1], [0], [0], [1], [0, 0, 1, 1], [], []>} : vector<8x128xf32>, vector<128x128xf32>, vector<8x128xf32> -> vector<8x128xf32>
    %c0_7 = arith.constant 0 : index
    %c0_8 = arith.constant 0 : index
    %9 = vector.load %arg4[%c0_7, %c0_8] : memref<128x128xf32, #tpu.memory_space<vmem>>, vector<128x128xf32>
    %cst_9 = arith.constant dense<0.000000e+00> : vector<8x128xf32>
    %10 = tpu.matmul %1, %9, %cst_9 {dimension_numbers = #tpu.dot_dimension_numbers<[1], [0], [0], [1], [0, 0, 1, 1], [], []>} : vector<8x128xf32>, vector<128x128xf32>, vector<8x128xf32> -> vector<8x128xf32>
    %11 = arith.addf %8, %10 : vector<8x128xf32>
    %12 = vector.broadcast %3 : vector<1x128xf32> to vector<8x128xf32>
    %13 = arith.addf %11, %12 : vector<8x128xf32>
    %14 = arith.negf %13 : vector<8x128xf32>
    %15 = math.exp %14 : vector<8x128xf32>
    %cst_10 = arith.constant 1.000000e+00 : f32
    %16 = vector.broadcast %cst_10 : f32 to vector<8x128xf32>
    %17 = arith.addf %16, %15 : vector<8x128xf32>
    %18 = arith.divf %16, %17 : vector<8x128xf32>
    %c0_11 = arith.constant 0 : index
    %c0_12 = arith.constant 0 : index
    %19 = vector.load %arg5[%c0_11, %c0_12] : memref<128x128xf32, #tpu.memory_space<vmem>>, vector<128x128xf32>
    %cst_13 = arith.constant dense<0.000000e+00> : vector<8x128xf32>
    %20 = tpu.matmul %1, %19, %cst_13 {dimension_numbers = #tpu.dot_dimension_numbers<[1], [0], [0], [1], [0, 0, 1, 1], [], []>} : vector<8x128xf32>, vector<128x128xf32>, vector<8x128xf32> -> vector<8x128xf32>
    %21 = vector.broadcast %4 : vector<1x128xf32> to vector<8x128xf32>
    %22 = arith.addf %20, %21 : vector<8x128xf32>
    %23 = arith.subf %22, %0 : vector<8x128xf32>
    %24 = arith.mulf %18, %23 : vector<8x128xf32>
    %25 = arith.addf %0, %24 : vector<8x128xf32>
    %cst_14 = arith.constant dense<0.000000e+00> : vector<8xf32>
    %26 = vector.multi_reduction <add>, %25, %cst_14 [1] : vector<8x128xf32> to vector<8xf32>
    %27 = vector.shape_cast %26 : vector<8xf32> to vector<8x1xf32>
    %cst_15 = arith.constant 3.125000e-02 : f32
    %28 = vector.broadcast %cst_15 : f32 to vector<8x1xf32>
    %29 = arith.mulf %27, %28 : vector<8x1xf32>
    %30 = arith.mulf %25, %25 : vector<8x128xf32>
    %cst_16 = arith.constant dense<0.000000e+00> : vector<8xf32>
    %31 = vector.multi_reduction <add>, %30, %cst_16 [1] : vector<8x128xf32> to vector<8xf32>
    %32 = vector.shape_cast %31 : vector<8xf32> to vector<8x1xf32>
    %cst_17 = arith.constant 3.125000e-02 : f32
    %33 = vector.broadcast %cst_17 : f32 to vector<8x1xf32>
    %34 = arith.mulf %32, %33 : vector<8x1xf32>
    %35 = arith.mulf %29, %29 : vector<8x1xf32>
    %36 = arith.subf %34, %35 : vector<8x1xf32>
    %cst_18 = arith.constant 9.99999974E-6 : f32
    %37 = vector.broadcast %cst_18 : f32 to vector<8x1xf32>
    %38 = arith.addf %36, %37 : vector<8x1xf32>
    %39 = math.rsqrt %38 : vector<8x1xf32>
    %40 = vector.broadcast %39 : vector<8x1xf32> to vector<8x128xf32>
    %41 = vector.broadcast %5 : vector<1x128xf32> to vector<8x128xf32>
    %42 = arith.mulf %40, %41 : vector<8x128xf32>
    %43 = vector.broadcast %29 : vector<8x1xf32> to vector<8x128xf32>
    %44 = arith.subf %25, %43 : vector<8x128xf32>
    %45 = arith.mulf %44, %42 : vector<8x128xf32>
    %46 = vector.broadcast %6 : vector<1x128xf32> to vector<8x128xf32>
    %47 = arith.addf %45, %46 : vector<8x128xf32>
    %c0_19 = arith.constant 0 : index
    %c0_20 = arith.constant 0 : index
    %48 = vector.load %arg7[%c0_19, %c0_20] : memref<8x128xf32, #tpu.memory_space<vmem>>, vector<8x128xf32>
    tpu.vector_store %arg7[%c0_19, %c0_20], %47 {strides = array<i32>} : memref<8x128xf32, #tpu.memory_space<vmem>>, vector<8x128xf32>,
    return
  }
  func.func @transform_0(%arg0: i32) -> (i32, i32) {
    %c0_i32 = arith.constant 0 : i32
    %c0_i32_0 = arith.constant 0 : i32
    return %arg0, %c0_i32 : i32, i32
  }
  func.func @transform_1(%arg0: i32) -> (i32, i32) {
    %c0_i32 = arith.constant 0 : i32
    %c0_i32_0 = arith.constant 0 : i32
    return %arg0, %c0_i32 : i32, i32
  }
  func.func @transform_2(%arg0: i32) -> (i32, i32) {
    %c0_i32 = arith.constant 0 : i32
    %c0_i32_0 = arith.constant 0 : i32
    %c0_i32_1 = arith.constant 0 : i32
    return %c0_i32, %c0_i32_0 : i32, i32
  }
  func.func @transform_3(%arg0: i32) -> (i32, i32) {
    %c0_i32 = arith.constant 0 : i32
    %c0_i32_0 = arith.constant 0 : i32
    %c0_i32_1 = arith.constant 0 : i32
    return %c0_i32, %c0_i32_0 : i32, i32
  }
  func.func @transform_4(%arg0: i32) -> (i32, i32) {
    %c0_i32 = arith.constant 0 : i32
    %c0_i32_0 = arith.constant 0 : i32
    %c0_i32_1 = arith.constant 0 : i32
    return %c0_i32, %c0_i32_0 : i32, i32
  }
  func.func @transform_5(%arg0: i32) -> (i32, i32) {
    %c0_i32 = arith.constant 0 : i32
    %c0_i32_0 = arith.constant 0 : i32
    %c0_i32_1 = arith.constant 0 : i32
    return %c0_i32, %c0_i32_0 : i32, i32
  }
  func.func @transform_6(%arg0: i32) -> (i32, i32) {
    %c0_i32 = arith.constant 0 : i32
    %c0_i32_0 = arith.constant 0 : i32
    return %arg0, %c0_i32 : i32, i32
  }
}

</mosaic_0001>

<llo_original>
// kernel: _fused_forward.1
$region0: #{_fused_forward.1}
  #allocation0 [shape = 'u32[]', space=smem, size = 0x4, offset = 0x4, fixed_abs, tag = 'smem constant byte address 0x4 - core index']
  #allocation1 [shape = 'u32[144,128]{1,0:T(1,128)}', space=vmem, size = 0x12000, scoped, tag = 'internal scratch']
  %s0 = inlined_call_operand.hbm [shape: f32[16,128], index: 0, kind: input, shape index: {}]
  %s1 = inlined_call_operand.hbm [shape: f32[16,128], index: 1, kind: input, shape index: {}]
  %s2 = inlined_call_operand.hbm [shape: f32[128,128], index: 2, kind: input, shape index: {}]
  %s3 = inlined_call_operand.hbm [shape: f32[128,128], index: 3, kind: input, shape index: {}]
  %s4 = inlined_call_operand.hbm [shape: f32[128,128], index: 4, kind: input, shape index: {}]
  %s5 = inlined_call_operand.vmem [shape: f32[8,128], index: 5, kind: input, shape index: {}]
  %s6 = inlined_call_operand.hbm [shape: f32[16,128], index: 6, kind: output, shape index: {}]
  %s7 = sld [smem:[#allocation0]]
  $region77: #{_fused_forward.1} parent=0
    _
  %s9 = ssub.s32 1, %s7
  %s10 = scalar_select 0, %s9, %s7
  $region1: #{_fused_forward.1} parent=0
    #allocation2 [shape = 'u8[8192]{0}', space=vmem, size = 0x2000, scoped, tag = 'input window, operand 0']
    #allocation3 [shape = 's32[2]{0}', space=sflag, size = 0x8, scoped, tag = 'scoped memory for _fused_forward.1']
    #allocation4 [shape = 's32[2]{0}', space=sflag, size = 0x8, scoped, tag = 'scoped memory for _fused_forward.1']
    #allocation5 [shape = 'u8[8192]{0}', space=vmem, size = 0x2000, scoped, tag = 'input window, operand 1']
    #allocation6 [shape = 's32[2]{0}', space=sflag, size = 0x8, scoped, tag = 'scoped memory for _fused_forward.1']
    #allocation7 [shape = 'u8[65536]{0}', space=vmem, size = 0x10000, scoped, tag = 'input window, operand 2, single buffered']
    #allocation8 [shape = 'u8[65536]{0}', space=vmem, size = 0x10000, scoped, tag = 'input window, operand 3, single buffered']
    #allocation9 [shape = 's32[1]{0}', space=sflag, size = 0x4, scoped, tag = 'scoped memory for _fused_forward.1']
    #allocation10 [shape = 'u8[65536]{0}', space=vmem, size = 0x10000, scoped, tag = 'input window, operand 4, single buffered']
    #allocation11 [shape = 'u8[8192]{0}', space=vmem, size = 0x2000, scoped, tag = 'output window, operand 0']
    %11 = vsyncpa [#allocation3], 0
    %s12 = scalar_lea.sflag [#allocation3], 1
    %13 = vsyncpa %s12, 0
    %14 = vsyncpa [#allocation6], 0
    %s15 = scalar_lea.sflag [#allocation6], 1
    %16 = vsyncpa %s15, 0
    %17 = vsyncpa [#allocation9], 0
    %18 = vsyncpa [#allocation4], 0
    %s19 = scalar_lea.sflag [#allocation4], 1
    %20 = vsyncpa %s19, 0
    loop: start=0, step=1, limit=4
    $region2: #{_fused_forward.1} parent=1 // loop_pre_header
      _
    $region3: #{_fused_forward.1} parent=1 // loop_header
      %s22 = sphi 0, %s26
      %p23 = scmp.ge.s32.totalorder %s22, 4
      %s32 = sphi 0, %s34
      %s35 = sphi 0, %s32
      %s36 = sphi 0, %s35
      %s52 = sphi 0, %s36
      %s58 = sphi 0, %s60
      %s61 = sphi 0, %s58
      %s62 = sphi 0, %s61
      %s78 = sphi 0, %s62
      %s82 = sphi 0, %s82
      %s84 = sphi 0, %s82
      %s85 = sphi 0, %s84
      %s99 = sphi 0, %s85
      %s103 = sphi 0, %s103
      %s105 = sphi 0, %s103
      %s106 = sphi 0, %s105
      %s120 = sphi 0, %s106
      %s124 = sphi 0, %s124
      %s126 = sphi 0, %s124
      %s127 = sphi 0, %s126
      %s141 = sphi 0, %s127
      %s145 = sphi 0, %s145
      %s147 = sphi 0, %s145
      %s148 = sphi 0, %s147
      %s162 = sphi 0, %s148
      %s168 = sphi 0, %s170
      %s171 = sphi 0, %s168
      %s172 = sphi 0, %s171
      %s188 = sphi 0, %s172
    $region4: #{_fused_forward.1} parent=1 // loop_header_branch
      %25 = sbr.rel (%p23) target = $region8
    $region5: #{_fused_forward.1} parent=1 // loop_body
      %s27 = ssub.s32 %s22, 1
      %s28 = ssub.s32 %s22, 2
      %s29 = sadd.s32 %s22, 1
      %s30 = ssub.s32 %s22, %s29
      %p31 = scmp.eq.s32.totalorder %s30, 0
      %s33 = sadd.s32 %s32, 1
      %s34 = scalar_select %p31, %s32, %s33
      %p37 = pneg %p31
      %p38 = scmp.eq.s32.totalorder %s22, 1
      %p39 = por %p37, %p38
      %p40 = scmp.ne.s32.totalorder %s32, %s35
      %p41 = scmp.eq.s32.totalorder %s22, 0
      %p42 = por %p40, %p41
      %p43 = scmp.ne.s32.totalorder %s32, %s35
      %p44 = scmp.eq.s32.totalorder %s27, 1
      %p45 = por %p43, %p44
      %p46 = scmp.ne.s32.totalorder %s35, %s36
      %p47 = scmp.eq.s32.totalorder %s27, 0
      %p48 = por %p46, %p47
      %p49 = scmp.ne.s32.totalorder %s35, %s36
      %p50 = scmp.eq.s32.totalorder %s28, 1
      %p51 = por %p49, %p50
      %p53 = scmp.ne.s32.totalorder %s36, %s52
      %p54 = scmp.eq.s32.totalorder %s28, 0
      %p55 = por %p53, %p54
      %s56 = ssub.s32 %s22, %s29
      %p57 = scmp.eq.s32.totalorder %s56, 0
      %s59 = sadd.s32 %s58, 1
      %s60 = scalar_select %p57, %s58, %s59
      %p63 = pneg %p57
      %p64 = scmp.eq.s32.totalorder %s22, 1
      %p65 = por %p63, %p64
      %p66 = scmp.ne.s32.totalorder %s58, %s61
      %p67 = scmp.eq.s32.totalorder %s22, 0
      %p68 = por %p66, %p67
      %p69 = scmp.ne.s32.totalorder %s58, %s61
      %p70 = scmp.eq.s32.totalorder %s27, 1
      %p71 = por %p69, %p70
      %p72 = scmp.ne.s32.totalorder %s61, %s62
      %p73 = scmp.eq.s32.totalorder %s27, 0
      %p74 = por %p72, %p73
      %p75 = scmp.ne.s32.totalorder %s61, %s62
      %p76 = scmp.eq.s32.totalorder %s28, 1
      %p77 = por %p75, %p76
      %p79 = scmp.ne.s32.totalorder %s62, %s78
      %p80 = scmp.eq.s32.totalorder %s28, 0
      %p81 = por %p79, %p80
      %s83 = sadd.s32 %s82, 1
      %p86 = scmp.eq.s32.totalorder %s22, 1
      %p87 = scmp.ne.s32.totalorder %s82, %s84
      %p88 = scmp.eq.s32.totalorder %s22, 0
      %p89 = por %p87, %p88
      %p90 = scmp.ne.s32.totalorder %s82, %s84
      %p91 = scmp.eq.s32.totalorder %s27, 1
      %p92 = por %p90, %p91
      %p93 = scmp.ne.s32.totalorder %s84, %s85
      %p94 = scmp.eq.s32.totalorder %s27, 0
      %p95 = por %p93, %p94
      %p96 = scmp.ne.s32.totalorder %s84, %s85
      %p97 = scmp.eq.s32.totalorder %s28, 1
      %p98 = por %p96, %p97
      %p100 = scmp.ne.s32.totalorder %s85, %s99
      %p101 = scmp.eq.s32.totalorder %s28, 0
      %p102 = por %p100, %p101
      %s104 = sadd.s32 %s103, 1
      %p107 = scmp.eq.s32.totalorder %s22, 1
      %p108 = scmp.ne.s32.totalorder %s103, %s105
      %p109 = scmp.eq.s32.totalorder %s22, 0
      %p110 = por %p108, %p109
      %p111 = scmp.ne.s32.totalorder %s103, %s105
      %p112 = scmp.eq.s32.totalorder %s27, 1
      %p113 = por %p111, %p112
      %p114 = scmp.ne.s32.totalorder %s105, %s106
      %p115 = scmp.eq.s32.totalorder %s27, 0
      %p116 = por %p114, %p115
      %p117 = scmp.ne.s32.totalorder %s105, %s106
      %p118 = scmp.eq.s32.totalorder %s28, 1
      %p119 = por %p117, %p118
      %p121 = scmp.ne.s32.totalorder %s106, %s120
      %p122 = scmp.eq.s32.totalorder %s28, 0
      %p123 = por %p121, %p122
      %s125 = sadd.s32 %s124, 1
      %p128 = scmp.eq.s32.totalorder %s22, 1
      %p129 = scmp.ne.s32.totalorder %s124, %s126
      %p130 = scmp.eq.s32.totalorder %s22, 0
      %p131 = por %p129, %p130
      %p132 = scmp.ne.s32.totalorder %s124, %s126
      %p133 = scmp.eq.s32.totalorder %s27, 1
      %p134 = por %p132, %p133
      %p135 = scmp.ne.s32.totalorder %s126, %s127
      %p136 = scmp.eq.s32.totalorder %s27, 0
      %p137 = por %p135, %p136
      %p138 = scmp.ne.s32.totalorder %s126, %s127
      %p139 = scmp.eq.s32.totalorder %s28, 1
      %p140 = por %p138, %p139
      %p142 = scmp.ne.s32.totalorder %s127, %s141
      %p143 = scmp.eq.s32.totalorder %s28, 0
      %p144 = por %p142, %p143
      %s146 = sadd.s32 %s145, 1
      %p149 = scmp.eq.s32.totalorder %s22, 1
      %p150 = scmp.ne.s32.totalorder %s145, %s147
      %p151 = scmp.eq.s32.totalorder %s22, 0
      %p152 = por %p150, %p151
      %p153 = scmp.ne.s32.totalorder %s145, %s147
      %p154 = scmp.eq.s32.totalorder %s27, 1
      %p155 = por %p153, %p154
      %p156 = scmp.ne.s32.totalorder %s147, %s148
      %p157 = scmp.eq.s32.totalorder %s27, 0
      %p158 = por %p156, %p157
      %p159 = scmp.ne.s32.totalorder %s147, %s148
      %p160 = scmp.eq.s32.totalorder %s28, 1
      %p161 = por %p159, %p160
      %p163 = scmp.ne.s32.totalorder %s148, %s162
      %p164 = scmp.eq.s32.totalorder %s28, 0
      %p165 = por %p163, %p164
      %s166 = ssub.s32 %s22, %s29
      %p167 = scmp.eq.s32.totalorder %s166, 0
      %s169 = sadd.s32 %s168, 1
      %s170 = scalar_select %p167, %s168, %s169
      %p173 = pneg %p167
      %p174 = scmp.eq.s32.totalorder %s22, 1
      %p175 = por %p173, %p174
      %p176 = scmp.ne.s32.totalorder %s168, %s171
      %p177 = scmp.eq.s32.totalorder %s22, 0
      %p178 = por %p176, %p177
      %p179 = scmp.ne.s32.totalorder %s168, %s171
      %p180 = scmp.eq.s32.totalorder %s27, 1
      %p181 = por %p179, %p180
      %p182 = scmp.ne.s32.totalorder %s171, %s172
      %p183 = scmp.eq.s32.totalorder %s27, 0
      %p184 = por %p182, %p183
      %p185 = scmp.ne.s32.totalorder %s171, %s172
      %p186 = scmp.eq.s32.totalorder %s28, 1
      %p187 = por %p185, %p186
      %p189 = scmp.ne.s32.totalorder %s172, %s188
      %p190 = scmp.eq.s32.totalorder %s28, 0
      %p191 = por %p189, %p190
      %p192 = scmp.le.s32.totalorder 1, %s22
      %p193 = scmp.lt.s32.totalorder %s22, 3
      %p194 = pnand %p192, %p193
      %p195 = pneg %p194
      // Predicated region
      $region9: #{_fused_forward.1} parent=5 // pred_check
        _
      $region10: #{_fused_forward.1} parent=5 // pred_check_branch
        %197 = sbr.rel (%p194) target = $region12
      $region11: #{_fused_forward.1} parent=5 // pred_region
        %s198 = ssub.s32 %s22, 1
        // Predicated region
        $region13: #{_fused_forward.1} parent=11 // pred_check
          %p199 = pneg %p95
        $region14: #{_fused_forward.1} parent=11 // pred_check_branch
          %201 = sbr.rel (%p199) target = $region16
        $region15: #{_fused_forward.1} parent=11 // pred_region
          %s203 = ssub.s32 2048, 2048
          %204 = vsyncadd [#allocation6], %s203
          %s205 = sshll.u32 [#allocation7], 4
          %s206 = int_to_ptr.vmem [resolvable:$true] %s205
          %211 = dma.hbm_to_vmem [thread:$0]  %s2, 2048, %s206, [#allocation6], 128, 128, 8
        $region16: #{_fused_forward.1} parent=11 // pred_fallthru
          _
        // Predicated region
        $region17: #{_fused_forward.1} parent=11 // pred_check
          %p212 = pneg %p116
        $region18: #{_fused_forward.1} parent=11 // pred_check_branch
          %214 = sbr.rel (%p212) target = $region20
        $region19: #{_fused_forward.1} parent=11 // pred_region
          %s216 = ssub.s32 2048, 2048
          %217 = vsyncadd [#allocation9], %s216
          %s218 = sshll.u32 [#allocation8], 4
          %s219 = int_to_ptr.vmem [resolvable:$true] %s218
          %224 = dma.hbm_to_vmem [thread:$0]  %s3, 2048, %s219, [#allocation9], 128, 128, 8
        $region20: #{_fused_forward.1} parent=11 // pred_fallthru
          _
        // Predicated region
        $region21: #{_fused_forward.1} parent=11 // pred_check
          %p225 = pneg %p137
        $region22: #{_fused_forward.1} parent=11 // pred_check_branch
          %227 = sbr.rel (%p225) target = $region24
        $region23: #{_fused_forward.1} parent=11 // pred_region
          %s229 = ssub.s32 2048, 2048
          %230 = vsyncadd [#allocation9], %s229
          %s231 = sshll.u32 [#allocation10], 4
          %s232 = int_to_ptr.vmem [resolvable:$true] %s231
          %237 = dma.hbm_to_vmem [thread:$0]  %s4, 2048, %s232, [#allocation9], 128, 128, 8
        $region24: #{_fused_forward.1} parent=11 // pred_fallthru
          _
        // Predicated region
        $region25: #{_fused_forward.1} parent=11 // pred_check
          %p238 = pneg %p158
        $region26: #{_fused_forward.1} parent=11 // pred_check_branch
          %240 = sbr.rel (%p238) target = $region28
        $region27: #{_fused_forward.1} parent=11 // pred_region
          _
        $region28: #{_fused_forward.1} parent=11 // pred_fallthru
          _
      $region12: #{_fused_forward.1} parent=5 // pred_fallthru
        _
      %p241 = scmp.lt.s32.totalorder %s22, 2
      // Predicated region
      $region29: #{_fused_forward.1} parent=5 // pred_check
        %p242 = pneg %p241
      $region30: #{_fused_forward.1} parent=5 // pred_check_branch
        %244 = sbr.rel (%p242) target = $region32
      $region31: #{_fused_forward.1} parent=5 // pred_region
        // Predicated region
        $region33: #{_fused_forward.1} parent=31 // pred_check
          %p245 = pneg %p42
        $region34: #{_fused_forward.1} parent=31 // pred_check_branch
          %247 = sbr.rel (%p245) target = $region36
        $region35: #{_fused_forward.1} parent=31 // pred_region
          %s248 = sand.u32 %s32, 1
          %s249 = scalar_lea.sflag [#allocation3], %s248
          %s250 = sand.u32 %s32, 1
          %s251 = smul.addr %s250, 8
          %s252 = scalar_lea.vmem [#allocation2], %s251
          %s254 = ssub.s32 128, 128
          %255 = vsyncadd %s249, %s254
          %s256 = smul.addr %s22, 128
          %s257 = scalar_lea.hbm %s0, %s256
          %s259 = sshll.u32 %s252, 4
          %s260 = int_to_ptr.vmem [resolvable:$true] %s259
          %262 = dma.hbm_to_vmem [thread:$0]  %s257, 128, %s260, %s249
        $region36: #{_fused_forward.1} parent=31 // pred_fallthru
          _
        // Predicated region
        $region37: #{_fused_forward.1} parent=31 // pred_check
          %p263 = pneg %p68
        $region38: #{_fused_forward.1} parent=31 // pred_check_branch
          %265 = sbr.rel (%p263) target = $region40
        $region39: #{_fused_forward.1} parent=31 // pred_region
          %s266 = sand.u32 %s22, 1
          %s267 = scalar_lea.sflag [#allocation6], %s266
          %s268 = sand.u32 %s58, 1
          %s269 = smul.addr %s268, 8
          %s270 = scalar_lea.vmem [#allocation5], %s269
          %s272 = ssub.s32 128, 128
          %273 = vsyncadd %s267, %s272
          %s274 = smul.addr %s22, 128
          %s275 = scalar_lea.hbm %s1, %s274
          %s277 = sshll.u32 %s270, 4
          %s278 = int_to_ptr.vmem [resolvable:$true] %s277
          %280 = dma.hbm_to_vmem [thread:$0]  %s275, 128, %s278, %s267
        $region40: #{_fused_forward.1} parent=31 // pred_fallthru
          _
      $region32: #{_fused_forward.1} parent=5 // pred_fallthru
        _
      %p281 = scmp.le.s32.totalorder 1, %s22
      %p282 = scmp.lt.s32.totalorder %s22, 3
      %p283 = pnand %p281, %p282
      %p284 = pneg %p283
      // Predicated region
      $region41: #{_fused_forward.1} parent=5 // pred_check
        _
      $region42: #{_fused_forward.1} parent=5 // pred_check_branch
        %286 = sbr.rel (%p283) target = $region44
      $region43: #{_fused_forward.1} parent=5 // pred_region
        %s287 = ssub.s32 %s22, 1
        %s288 = sand.u32 %s35, 1
        %s289 = scalar_lea.sflag [#allocation3], %s288
        %s290 = sand.u32 %s35, 1
        %s291 = smul.addr %s290, 8
        %s292 = scalar_lea.vmem [#allocation2], %s291
        // Predicated region
        $region45: #{_fused_forward.1} parent=43 // pred_check
          %p293 = pneg %p48
        $region46: #{_fused_forward.1} parent=43 // pred_check_branch
          %295 = sbr.rel (%p293) target = $region48
        $region47: #{_fused_forward.1} parent=43 // pred_region
          %296 = dma.done %s289, 128
        $region48: #{_fused_forward.1} parent=43 // pred_fallthru
          _
        %s297 = sand.u32 %s27, 1
        %s298 = scalar_lea.sflag [#allocation6], %s297
        %s299 = sand.u32 %s61, 1
        %s300 = smul.addr %s299, 8
        %s301 = scalar_lea.vmem [#allocation5], %s300
        // Predicated region
        $region49: #{_fused_forward.1} parent=43 // pred_check
          %p302 = pneg %p74
        $region50: #{_fused_forward.1} parent=43 // pred_check_branch
          %304 = sbr.rel (%p302) target = $region52
        $region51: #{_fused_forward.1} parent=43 // pred_region
          %305 = dma.done %s298, 128
        $region52: #{_fused_forward.1} parent=43 // pred_fallthru
          _
        // Predicated region
        $region53: #{_fused_forward.1} parent=43 // pred_check
          %p306 = pneg %p95
        $region54: #{_fused_forward.1} parent=43 // pred_check_branch
          %308 = sbr.rel (%p306) target = $region56
        $region55: #{_fused_forward.1} parent=43 // pred_region
          %309 = dma.done [#allocation6], 2048
        $region56: #{_fused_forward.1} parent=43 // pred_fallthru
          _
        // Predicated region
        $region57: #{_fused_forward.1} parent=43 // pred_check
          %p310 = pneg %p116
        $region58: #{_fused_forward.1} parent=43 // pred_check_branch
          %312 = sbr.rel (%p310) target = $region60
        $region59: #{_fused_forward.1} parent=43 // pred_region
          %313 = dma.done [#allocation9], 2048
        $region60: #{_fused_forward.1} parent=43 // pred_fallthru
          _
        // Predicated region
        $region61: #{_fused_forward.1} parent=43 // pred_check
          %p314 = pneg %p137
        $region62: #{_fused_forward.1} parent=43 // pred_check_branch
          %316 = sbr.rel (%p314) target = $region64
        $region63: #{_fused_forward.1} parent=43 // pred_region
          %317 = dma.done [#allocation9], 2048
        $region64: #{_fused_forward.1} parent=43 // pred_fallthru
          _
        %s318 = sand.u32 %s35, 1
        %s319 = scalar_lea.sflag [#allocation3], %s318
        %s320 = sand.u32 %s35, 1
        %s321 = smul.addr %s320, 8
        %s322 = scalar_lea.vmem [#allocation2], %s321
        %p323 = pneg %p48
        %p324 = pneg %p45
        %s325 = sand.u32 %s27, 1
        %s326 = scalar_lea.sflag [#allocation6], %s325
        %s327 = sand.u32 %s61, 1
        %s328 = smul.addr %s327, 8
        %s329 = scalar_lea.vmem [#allocation5], %s328
        %p330 = pneg %p74
        %p331 = pneg %p71
        %p332 = pneg %p95
        %p333 = pneg %p92
        %p334 = pneg %p116
        %p335 = pneg %p113
        %p336 = pneg %p137
        %p337 = pneg %p134
        %p338 = pneg %p158
        %p339 = pneg %p155
        %p340 = pneg %p184
        %p341 = pneg %p181
        %s342 = sand.u32 %s171, 1
        %s343 = scalar_lea.sflag [#allocation4], %s342
        %s344 = sand.u32 %s171, 1
        %s345 = smul.addr %s344, 8
        %s346 = scalar_lea.vmem [#allocation11], %s345
        %v347 = vld [vmem:[%s292] sm:$0xff]
        %v348 = vld [vmem:[%s301] sm:$0xff]
        %v349 = vld [vmem:[%s5] sm:$0xff]
        %v350 = vld [vmem:[#allocation7] sm:$0xff]
        %v351 = vld [vmem:[#allocation7 + $0x8] sm:$0xff]
        %v352 = vld [vmem:[#allocation7 + $0x10] sm:$0xff]
        %v353 = vld [vmem:[#allocation7 + $0x18] sm:$0xff]
        %v354 = vld [vmem:[#allocation7 + $0x20] sm:$0xff]
        %v355 = vld [vmem:[#allocation7 + $0x28] sm:$0xff]
        %v356 = vld [vmem:[#allocation7 + $0x30] sm:$0xff]
        %v357 = vld [vmem:[#allocation7 + $0x38] sm:$0xff]
        %v358 = vld [vmem:[#allocation7 + $0x40] sm:$0xff]
        %v359 = vld [vmem:[#allocation7 + $0x48] sm:$0xff]
        %v360 = vld [vmem:[#allocation7 + $0x50] sm:$0xff]
        %v361 = vld [vmem:[#allocation7 + $0x58] sm:$0xff]
        %v362 = vld [vmem:[#allocation7 + $0x60] sm:$0xff]
        %v363 = vld [vmem:[#allocation7 + $0x68] sm:$0xff]
        %v364 = vld [vmem:[#allocation7 + $0x70] sm:$0xff]
        %v365 = vld [vmem:[#allocation7 + $0x78] sm:$0xff]
        %v366 = vld [vmem:[#allocation8] sm:$0xff]
        %v367 = vld [vmem:[#allocation8 + $0x8] sm:$0xff]
        %v368 = vld [vmem:[#allocation8 + $0x10] sm:$0xff]
        %v369 = vld [vmem:[#allocation8 + $0x18] sm:$0xff]
        %v370 = vld [vmem:[#allocation8 + $0x20] sm:$0xff]
        %v371 = vld [vmem:[#allocation8 + $0x28] sm:$0xff]
        %v372 = vld [vmem:[#allocation8 + $0x30] sm:$0xff]
        %v373 = vld [vmem:[#allocation8 + $0x38] sm:$0xff]
        %v374 = vld [vmem:[#allocation8 + $0x40] sm:$0xff]
        %v375 = vld [vmem:[#allocation8 + $0x48] sm:$0xff]
        %v376 = vld [vmem:[#allocation8 + $0x50] sm:$0xff]
        %v377 = vld [vmem:[#allocation8 + $0x58] sm:$0xff]
        %v378 = vld [vmem:[#allocation8 + $0x60] sm:$0xff]
        %v379 = vld [vmem:[#allocation8 + $0x68] sm:$0xff]
        %v380 = vld [vmem:[#allocation8 + $0x70] sm:$0xff]
        %v381 = vld [vmem:[#allocation8 + $0x78] sm:$0xff]
        %382 = vmatprep.subr.mxu0 0.0
        %383 = vmatpush1.msra.mxu0 %v366
        %384 = vmatprep.subr.mxu0 0.0
        %385 = vmatpush1.msra.mxu0 %v367
        %386 = vmatprep.subr.mxu0 0.0
        %387 = vmatpush1.msra.mxu0 %v368
        %388 = vmatprep.subr.mxu0 0.0
        %389 = vmatpush1.msra.mxu0 %v369
        %390 = vmatprep.subr.mxu0 0.0
        %391 = vmatpush1.msra.mxu0 %v370
        %392 = vmatprep.subr.mxu0 0.0
        %393 = vmatpush1.msra.mxu0 %v371
        %394 = vmatprep.subr.mxu0 0.0
        %395 = vmatpush1.msra.mxu0 %v372
        %396 = vmatprep.subr.mxu0 0.0
        %397 = vmatpush1.msra.mxu0 %v373
        %398 = vmatprep.subr.mxu0 0.0
        %399 = vmatpush1.msra.mxu0 %v374
        %400 = vmatprep.subr.mxu0 0.0
        %401 = vmatpush1.msra.mxu0 %v375
        %402 = vmatprep.subr.mxu0 0.0
        %403 = vmatpush1.msra.mxu0 %v376
        %404 = vmatprep.subr.mxu0 0.0
        %405 = vmatpush1.msra.mxu0 %v377
        %406 = vmatprep.subr.mxu0 0.0
        %407 = vmatpush1.msra.mxu0 %v378
        %408 = vmatprep.subr.mxu0 0.0
        %409 = vmatpush1.msra.mxu0 %v379
        %410 = vmatprep.subr.mxu0 0.0
        %411 = vmatpush1.msra.mxu0 %v380
        %412 = vmatprep.subr.mxu0 0.0
        %413 = vmatpush1.msra.mxu0 %v381
        %414 = vmatprep.subr.mxu0 0.0
        %415 = vmatpush1.msra.mxu0 0.0
        %416 = vmatprep.subr.mxu0 0.0
        %417 = vmatpush1.msra.mxu0 0.0
        %418 = vmatprep.subr.mxu0 0.0
        %419 = vmatpush1.msra.mxu0 0.0
        %420 = vmatprep.subr.mxu0 0.0
        %421 = vmatpush1.msra.mxu0 0.0
        %422 = vmatprep.subr.mxu0 0.0
        %423 = vmatpush1.msra.mxu0 0.0
        %424 = vmatprep.subr.mxu0 0.0
        %425 = vmatpush1.msra.mxu0 0.0
        %426 = vmatprep.subr.mxu0 0.0
        %427 = vmatpush1.msra.mxu0 0.0
        %428 = vmatprep.subr.mxu0 0.0
        %429 = vmatpush1.msra.mxu0 0.0
        %430 = vmatprep.subr.mxu0 0.0
        %431 = vmatpush1.msra.mxu0 0.0
        %432 = vmatprep.subr.mxu0 0.0
        %433 = vmatpush1.msra.mxu0 0.0
        %434 = vmatprep.subr.mxu0 0.0
        %435 = vmatpush1.msra.mxu0 0.0
        %436 = vmatprep.subr.mxu0 0.0
        %437 = vmatpush1.msra.mxu0 0.0
        %438 = vmatprep.subr.mxu0 0.0
        %439 = vmatpush1.msra.mxu0 0.0
        %440 = vmatprep.subr.mxu0 0.0
        %441 = vmatpush1.msra.mxu0 0.0
        %442 = vmatprep.subr.mxu0 0.0
        %443 = vmatpush1.msra.mxu0 0.0
        %444 = vmatprep.subr.mxu0 0.0
        %445 = vmatpush1.msra.mxu0 0.0
        %446 = vmatprep.mubr.f32.mxu0 0.0
        %447 = vmatmul.mubr.f32.gmra.mrb[0].mxu0 %v348
        %v448 = vpop.f32.mrb[0].mxu0
        %v449 = vadd.f32 0.0, %v448
        %v450 = vpop.f32.mrb[0].mxu0
        %451 = vdwg.mxu0
        %452 = vmatprep.subr.mxu0 0.0
        %453 = vmatpush1.msra.mxu0 %v350
        %454 = vmatprep.subr.mxu0 0.0
        %455 = vmatpush1.msra.mxu0 %v351
        %456 = vmatprep.subr.mxu0 0.0
        %457 = vmatpush1.msra.mxu0 %v352
        %458 = vmatprep.subr.mxu0 0.0
        %459 = vmatpush1.msra.mxu0 %v353
        %460 = vmatprep.subr.mxu0 0.0
        %461 = vmatpush1.msra.mxu0 %v354
        %462 = vmatprep.subr.mxu0 0.0
        %463 = vmatpush1.msra.mxu0 %v355
        %464 = vmatprep.subr.mxu0 0.0
        %465 = vmatpush1.msra.mxu0 %v356
        %466 = vmatprep.subr.mxu0 0.0
        %467 = vmatpush1.msra.mxu0 %v357
        %468 = vmatprep.subr.mxu0 0.0
        %469 = vmatpush1.msra.mxu0 %v358
        %470 = vmatprep.subr.mxu0 0.0
        %471 = vmatpush1.msra.mxu0 %v359
        %472 = vmatprep.subr.mxu0 0.0
        %473 = vmatpush1.msra.mxu0 %v360
        %474 = vmatprep.subr.mxu0 0.0
        %475 = vmatpush1.msra.mxu0 %v361
        %476 = vmatprep.subr.mxu0 0.0
        %477 = vmatpush1.msra.mxu0 %v362
        %478 = vmatprep.subr.mxu0 0.0
        %479 = vmatpush1.msra.mxu0 %v363
        %480 = vmatprep.subr.mxu0 0.0
        %481 = vmatpush1.msra.mxu0 %v364
        %482 = vmatprep.subr.mxu0 0.0
        %483 = vmatpush1.msra.mxu0 %v365
        %484 = vmatprep.subr.mxu0 0.0
        %485 = vmatpush1.msra.mxu0 0.0
        %486 = vmatprep.subr.mxu0 0.0
        %487 = vmatpush1.msra.mxu0 0.0
        %488 = vmatprep.subr.mxu0 0.0
        %489 = vmatpush1.msra.mxu0 0.0
        %490 = vmatprep.subr.mxu0 0.0
        %491 = vmatpush1.msra.mxu0 0.0
        %492 = vmatprep.subr.mxu0 0.0
        %493 = vmatpush1.msra.mxu0 0.0
        %494 = vmatprep.subr.mxu0 0.0
        %495 = vmatpush1.msra.mxu0 0.0
        %496 = vmatprep.subr.mxu0 0.0
        %497 = vmatpush1.msra.mxu0 0.0
        %498 = vmatprep.subr.mxu0 0.0
        %499 = vmatpush1.msra.mxu0 0.0
        %500 = vmatprep.subr.mxu0 0.0
        %501 = vmatpush1.msra.mxu0 0.0
        %502 = vmatprep.subr.mxu0 0.0
        %503 = vmatpush1.msra.mxu0 0.0
        %504 = vmatprep.subr.mxu0 0.0
        %505 = vmatpush1.msra.mxu0 0.0
        %506 = vmatprep.subr.mxu0 0.0
        %507 = vmatpush1.msra.mxu0 0.0
        %508 = vmatprep.subr.mxu0 0.0
        %509 = vmatpush1.msra.mxu0 0.0
        %510 = vmatprep.subr.mxu0 0.0
        %511 = vmatpush1.msra.mxu0 0.0
        %512 = vmatprep.subr.mxu0 0.0
        %513 = vmatpush1.msra.mxu0 0.0
        %514 = vmatprep.subr.mxu0 0.0
        %515 = vmatpush1.msra.mxu0 0.0
        %516 = vmatprep.mubr.f32.mxu0 0.0
        %517 = vmatmul.mubr.f32.gmra.mrb[0].mxu0 %v347
        %v518 = vpop.f32.mrb[0].mxu0
        %v519 = vadd.f32 %v449, %v518
        %v520 = vpop.f32.mrb[0].mxu0
        %521 = vdwg.mxu0
        %v522 = vlaneseq
        %v523 = vshrl.u32 %v522, 7
        %v524 = vsub.s32 0, %v523
        %v525 = vrot.slane %v349, %v524
        %v526 = vadd.f32 %v519, %v525
        %v527 = vxor.u32 %v526, 2147483648
        %v528 = vmul.f32 %v527, 1.442695
        %v529 = vpow.pop %v528
        %v530 = vadd.f32 %v529, 1.0
        %v531 = vrcp.pop %v530
        %v532 = vmul.f32 1.0, %v531
        %v533 = vld [vmem:[#allocation10] sm:$0xff]
        %v534 = vld [vmem:[#allocation10 + $0x8] sm:$0xff]
        %v535 = vld [vmem:[#allocation10 + $0x10] sm:$0xff]
        %v536 = vld [vmem:[#allocation10 + $0x18] sm:$0xff]
        %v537 = vld [vmem:[#allocation10 + $0x20] sm:$0xff]
        %v538 = vld [vmem:[#allocation10 + $0x28] sm:$0xff]
        %v539 = vld [vmem:[#allocation10 + $0x30] sm:$0xff]
        %v540 = vld [vmem:[#allocation10 + $0x38] sm:$0xff]
        %v541 = vld [vmem:[#allocation10 + $0x40] sm:$0xff]
        %v542 = vld [vmem:[#allocation10 + $0x48] sm:$0xff]
        %v543 = vld [vmem:[#allocation10 + $0x50] sm:$0xff]
        %v544 = vld [vmem:[#allocation10 + $0x58] sm:$0xff]
        %v545 = vld [vmem:[#allocation10 + $0x60] sm:$0xff]
        %v546 = vld [vmem:[#allocation10 + $0x68] sm:$0xff]
        %v547 = vld [vmem:[#allocation10 + $0x70] sm:$0xff]
        %v548 = vld [vmem:[#allocation10 + $0x78] sm:$0xff]
        %v549 = vlaneseq
        %v550 = vshrl.u32 %v549, 7
        %v551 = vsub.s32 1, %v550
        %v552 = vrot.slane %v349, %v551
        %553 = vmatprep.subr.mxu0 0.0
        %554 = vmatpush1.msra.mxu0 %v533
        %555 = vmatprep.subr.mxu0 0.0
        %556 = vmatpush1.msra.mxu0 %v534
        %557 = vmatprep.subr.mxu0 0.0
        %558 = vmatpush1.msra.mxu0 %v535
        %559 = vmatprep.subr.mxu0 0.0
        %560 = vmatpush1.msra.mxu0 %v536
        %561 = vmatprep.subr.mxu0 0.0
        %562 = vmatpush1.msra.mxu0 %v537
        %563 = vmatprep.subr.mxu0 0.0
        %564 = vmatpush1.msra.mxu0 %v538
        %565 = vmatprep.subr.mxu0 0.0
        %566 = vmatpush1.msra.mxu0 %v539
        %567 = vmatprep.subr.mxu0 0.0
        %568 = vmatpush1.msra.mxu0 %v540
        %569 = vmatprep.subr.mxu0 0.0
        %570 = vmatpush1.msra.mxu0 %v541
        %571 = vmatprep.subr.mxu0 0.0
        %572 = vmatpush1.msra.mxu0 %v542
        %573 = vmatprep.subr.mxu0 0.0
        %574 = vmatpush1.msra.mxu0 %v543
        %575 = vmatprep.subr.mxu0 0.0
        %576 = vmatpush1.msra.mxu0 %v544
        %577 = vmatprep.subr.mxu0 0.0
        %578 = vmatpush1.msra.mxu0 %v545
        %579 = vmatprep.subr.mxu0 0.0
        %580 = vmatpush1.msra.mxu0 %v546
        %581 = vmatprep.subr.mxu0 0.0
        %582 = vmatpush1.msra.mxu0 %v547
        %583 = vmatprep.subr.mxu0 0.0
        %584 = vmatpush1.msra.mxu0 %v548
        %585 = vmatprep.subr.mxu0 0.0
        %586 = vmatpush1.msra.mxu0 0.0
        %587 = vmatprep.subr.mxu0 0.0
        %588 = vmatpush1.msra.mxu0 0.0
        %589 = vmatprep.subr.mxu0 0.0
        %590 = vmatpush1.msra.mxu0 0.0
        %591 = vmatprep.subr.mxu0 0.0
        %592 = vmatpush1.msra.mxu0 0.0
        %593 = vmatprep.subr.mxu0 0.0
        %594 = vmatpush1.msra.mxu0 0.0
        %595 = vmatprep.subr.mxu0 0.0
        %596 = vmatpush1.msra.mxu0 0.0
        %597 = vmatprep.subr.mxu0 0.0
        %598 = vmatpush1.msra.mxu0 0.0
        %599 = vmatprep.subr.mxu0 0.0
        %600 = vmatpush1.msra.mxu0 0.0
        %601 = vmatprep.subr.mxu0 0.0
        %602 = vmatpush1.msra.mxu0 0.0
        %603 = vmatprep.subr.mxu0 0.0
        %604 = vmatpush1.msra.mxu0 0.0
        %605 = vmatprep.subr.mxu0 0.0
        %606 = vmatpush1.msra.mxu0 0.0
        %607 = vmatprep.subr.mxu0 0.0
        %608 = vmatpush1.msra.mxu0 0.0
        %609 = vmatprep.subr.mxu0 0.0
        %610 = vmatpush1.msra.mxu0 0.0
        %611 = vmatprep.subr.mxu0 0.0
        %612 = vmatpush1.msra.mxu0 0.0
        %613 = vmatprep.subr.mxu0 0.0
        %614 = vmatpush1.msra.mxu0 0.0
        %615 = vmatprep.subr.mxu0 0.0
        %616 = vmatpush1.msra.mxu0 0.0
        %617 = vmatprep.mubr.f32.mxu0 0.0
        %618 = vmatmul.mubr.f32.gmra.mrb[0].mxu0 %v348
        %v619 = vpop.f32.mrb[0].mxu0
        %v620 = vadd.f32 %v552, %v619
        %v621 = vpop.f32.mrb[0].mxu0
        %622 = vdwg.mxu0
        %v623 = vsub.f32 %v620, %v347
        %v624 = vmul.f32 %v532, %v623
        %v625 = vadd.f32 %v347, %v624
        %626 = vadd.xlane.f32.xlu0 %v625
        %v627 = vpop.xlane.xlu0 %626
        %v628 = vmul.f32 %v627, 0.03125
        %v629 = vmul.f32 %v625, %v625
        %630 = vadd.xlane.f32.xlu0 %v629
        %v631 = vpop.xlane.xlu0 %630
        %v632 = vmul.f32 %v631, 0.03125
        %v633 = vmul.f32 %v628, %v628
        %v634 = vsub.f32 %v632, %v633
        %v635 = vadd.f32 %v634, 1e-05
        %v636 = vrsqrt.pop %v635
        %v637 = vlaneseq
        %v638 = vshrl.u32 %v637, 7
        %v639 = vsub.s32 2, %v638
        %v640 = vrot.slane %v349, %v639
        %v641 = vmul.f32 %v636, %v640
        %v642 = vsub.f32 %v625, %v628
        %v643 = vmul.f32 %v642, %v641
        %v644 = vlaneseq
        %v645 = vshrl.u32 %v644, 7
        %v646 = vsub.s32 3, %v645
        %v647 = vrot.slane %v349, %v646
        %v648 = vadd.f32 %v643, %v647
        %649 = vst [vmem:[%s346] sm:$0xff] %v648
        %s650 = sand.u32 %s171, 1
        %s651 = scalar_lea.sflag [#allocation4], %s650
        %s652 = sand.u32 %s171, 1
        %s653 = smul.addr %s652, 8
        %s654 = scalar_lea.vmem [#allocation11], %s653
        // Predicated region
        $region65: #{_fused_forward.1} parent=43 // pred_check
          %p655 = pneg %p181
        $region66: #{_fused_forward.1} parent=43 // pred_check_branch
          %657 = sbr.rel (%p655) target = $region68
        $region67: #{_fused_forward.1} parent=43 // pred_region
          %s659 = ssub.s32 128, 128
          %660 = vsyncadd %s651, %s659
          %s661 = smul.addr %s27, 128
          %s662 = scalar_lea.hbm %s6, %s661
          %s664 = sshll.u32 %s654, 4
          %s665 = int_to_ptr.vmem [resolvable:$true] %s664
          %667 = dma.vmem_to_hbm [thread:$0]  %s665, 128, %s662, %s651
        $region68: #{_fused_forward.1} parent=43 // pred_fallthru
          _
      $region44: #{_fused_forward.1} parent=5 // pred_fallthru
        _
      %p668 = scmp.le.s32.totalorder 2, %s22
      // Predicated region
      $region69: #{_fused_forward.1} parent=5 // pred_check
        %p669 = pneg %p668
      $region70: #{_fused_forward.1} parent=5 // pred_check_branch
        %671 = sbr.rel (%p669) target = $region72
      $region71: #{_fused_forward.1} parent=5 // pred_region
        %s672 = ssub.s32 %s22, 2
        // Predicated region
        $region73: #{_fused_forward.1} parent=71 // pred_check
          %p673 = pneg %p187
        $region74: #{_fused_forward.1} parent=71 // pred_check_branch
          %675 = sbr.rel (%p673) target = $region76
        $region75: #{_fused_forward.1} parent=71 // pred_region
          %s676 = sand.u32 %s172, 1
          %s677 = scalar_lea.sflag [#allocation4], %s676
          %s678 = sand.u32 %s172, 1
          %s679 = smul.addr %s678, 8
          %s680 = scalar_lea.vmem [#allocation11], %s679
          %681 = dma.done %s677, 128
        $region76: #{_fused_forward.1} parent=71 // pred_fallthru
          _
      $region72: #{_fused_forward.1} parent=5 // pred_fallthru
        _
    $region6: #{_fused_forward.1} parent=1 // loop_footer
      %s26 = sadd.s32 1, %s22
    $region7: #{_fused_forward.1} parent=1 // loop_footer_branch
      %21 = sbr.rel target = $region3
    $region8: #{_fused_forward.1} parent=1 // loop_exit
      _
    %682 = vsyncpa [#allocation3], 1
    %s683 = scalar_lea.sflag [#allocation3], 1
    %684 = vsyncpa %s683, 1
    %685 = vsyncpa [#allocation6], 1
    %s686 = scalar_lea.sflag [#allocation6], 1
    %687 = vsyncpa %s686, 1
    %688 = vsyncpa [#allocation9], 1
    %689 = vsyncpa [#allocation4], 1
    %s690 = scalar_lea.sflag [#allocation4], 1
    %691 = vsyncpa %s690, 1

// kernel: _fused_forward.1
$region0: #{_fused_forward.1}
  #allocation0 [shape = 'u32[]', space=smem, size = 0x4, offset = 0x4, fixed_abs, tag = 'smem constant byte address 0x4 - core index']
  #allocation1 [shape = 'u32[144,128]{1,0:T(1,128)}', space=vmem, size = 0x12000, scoped, tag = 'internal scratch']
  %s0 = inlined_call_operand.hbm [shape: f32[16,128], index: 0, kind: input, shape index: {}]
  %s1 = inlined_call_operand.hbm [shape: f32[16,128], index: 1, kind: input, shape index: {}]
  %s2 = inlined_call_operand.hbm [shape: f32[128,128], index: 2, kind: input, shape index: {}]
  %s3 = inlined_call_operand.hbm [shape: f32[128,128], index: 3, kind: input, shape index: {}]
  %s4 = inlined_call_operand.hbm [shape: f32[128,128], index: 4, kind: input, shape index: {}]
  %s5 = inlined_call_operand.vmem [shape: f32[8,128], index: 5, kind: input, shape index: {}]
  %s6 = inlined_call_operand.hbm [shape: f32[16,128], index: 6, kind: output, shape index: {}]
  %s7 = sld [smem:[#allocation0]]
  $region77: #{_fused_forward.1} parent=0
    _
  %s9 = ssub.s32 1, %s7
  %s10 = scalar_select 0, %s9, %s7
  $region1: #{_fused_forward.1} parent=0
    #allocation2 [shape = 'u8[8192]{0}', space=vmem, size = 0x2000, scoped, tag = 'input window, operand 0']
    #allocation3 [shape = 's32[2]{0}', space=sflag, size = 0x8, scoped, tag = 'scoped memory for _fused_forward.1']
    #allocation4 [shape = 's32[2]{0}', space=sflag, size = 0x8, scoped, tag = 'scoped memory for _fused_forward.1']
    #allocation5 [shape = 'u8[8192]{0}', space=vmem, size = 0x2000, scoped, tag = 'input window, operand 1']
    #allocation6 [shape = 's32[2]{0}', space=sflag, size = 0x8, scoped, tag = 'scoped memory for _fused_forward.1']
    #allocation7 [shape = 'u8[65536]{0}', space=vmem, size = 0x10000, scoped, tag = 'input window, operand 2, single buffered']
    #allocation8 [shape = 'u8[65536]{0}', space=vmem, size = 0x10000, scoped, tag = 'input window, operand 3, single buffered']
    #allocation9 [shape = 's32[1]{0}', space=sflag, size = 0x4, scoped, tag = 'scoped memory for _fused_forward.1']
    #allocation10 [shape = 'u8[65536]{0}', space=vmem, size = 0x10000, scoped, tag = 'input window, operand 4, single buffered']
    #allocation11 [shape = 'u8[8192]{0}', space=vmem, size = 0x2000, scoped, tag = 'output window, operand 0']
    %11 = vsyncpa [#allocation3], 0
    %s12 = scalar_lea.sflag [#allocation3], 1
    %13 = vsyncpa %s12, 0
    %14 = vsyncpa [#allocation6], 0
    %s15 = scalar_lea.sflag [#allocation6], 1
    %16 = vsyncpa %s15, 0
    %17 = vsyncpa [#allocation9], 0
    %18 = vsyncpa [#allocation4], 0
    %s19 = scalar_lea.sflag [#allocation4], 1
    %20 = vsyncpa %s19, 0
    loop: start=0, step=1, limit=4
    $region2: #{_fused_forward.1} parent=1 // loop_pre_header
      _
    $region3: #{_fused_forward.1} parent=1 // loop_header
      %s22 = sphi 0, %s26
      %p23 = scmp.ge.s32.totalorder %s22, 4
      %s32 = sphi 0, %s34
      %s35 = sphi 0, %s32
      %s36 = sphi 0, %s35
      %s52 = sphi 0, %s36
      %s58 = sphi 0, %s60
      %s61 = sphi 0, %s58
      %s62 = sphi 0, %s61
      %s78 = sphi 0, %s62
      %s82 = sphi 0, %s82
      %s84 = sphi 0, %s82
      %s85 = sphi 0, %s84
      %s99 = sphi 0, %s85
      %s103 = sphi 0, %s103
      %s105 = sphi 0, %s103
      %s106 = sphi 0, %s105
      %s120 = sphi 0, %s106
      %s124 = sphi 0, %s124
      %s126 = sphi 0, %s124
      %s127 = sphi 0, %s126
      %s141 = sphi 0, %s127
      %s145 = sphi 0, %s145
      %s147 = sphi 0, %s145
      %s148 = sphi 0, %s147
      %s162 = sphi 0, %s148
      %s168 = sphi 0, %s170
      %s171 = sphi 0, %s168
      %s172 = sphi 0, %s171
      %s188 = sphi 0, %s172
    $region4: #{_fused_forward.1} parent=1 // loop_header_branch
      %25 = sbr.rel (%p23) target = $region8
    $region5: #{_fused_forward.1} parent=1 // loop_body
      %s27 = ssub.s32 %s22, 1
      %s28 = ssub.s32 %s22, 2
      %s29 = sadd.s32 %s22, 1
      %s30 = ssub.s32 %s22, %s29
      %p31 = scmp.eq.s32.totalorder %s30, 0
      %s33 = sadd.s32 %s32, 1
      %s34 = scalar_select %p31, %s32, %s33
      %p37 = pneg %p31
      %p38 = scmp.eq.s32.totalorder %s22, 1
      %p39 = por %p37, %p38
      %p40 = scmp.ne.s32.totalorder %s32, %s35
      %p41 = scmp.eq.s32.totalorder %s22, 0
      %p42 = por %p40, %p41
      %p43 = scmp.ne.s32.totalorder %s32, %s35
      %p44 = scmp.eq.s32.totalorder %s27, 1
      %p45 = por %p43, %p44
      %p46 = scmp.ne.s32.totalorder %s35, %s36
      %p47 = scmp.eq.s32.totalorder %s27, 0
      %p48 = por %p46, %p47
      %p49 = scmp.ne.s32.totalorder %s35, %s36
      %p50 = scmp.eq.s32.totalorder %s28, 1
      %p51 = por %p49, %p50
      %p53 = scmp.ne.s32.totalorder %s36, %s52
      %p54 = scmp.eq.s32.totalorder %s28, 0
      %p55 = por %p53, %p54
      %s56 = ssub.s32 %s22, %s29
      %p57 = scmp.eq.s32.totalorder %s56, 0
      %s59 = sadd.s32 %s58, 1
      %s60 = scalar_select %p57, %s58, %s59
      %p63 = pneg %p57
      %p64 = scmp.eq.s32.totalorder %s22, 1
      %p65 = por %p63, %p64
      %p66 = scmp.ne.s32.totalorder %s58, %s61
      %p67 = scmp.eq.s32.totalorder %s22, 0
      %p68 = por %p66, %p67
      %p69 = scmp.ne.s32.totalorder %s58, %s61
      %p70 = scmp.eq.s32.totalorder %s27, 1
      %p71 = por %p69, %p70
      %p72 = scmp.ne.s32.totalorder %s61, %s62
      %p73 = scmp.eq.s32.totalorder %s27, 0
      %p74 = por %p72, %p73
      %p75 = scmp.ne.s32.totalorder %s61, %s62
      %p76 = scmp.eq.s32.totalorder %s28, 1
      %p77 = por %p75, %p76
      %p79 = scmp.ne.s32.totalorder %s62, %s78
      %p80 = scmp.eq.s32.totalorder %s28, 0
      %p81 = por %p79, %p80
      %s83 = sadd.s32 %s82, 1
      %p86 = scmp.eq.s32.totalorder %s22, 1
      %p87 = scmp.ne.s32.totalorder %s82, %s84
      %p88 = scmp.eq.s32.totalorder %s22, 0
      %p89 = por %p87, %p88
      %p90 = scmp.ne.s32.totalorder %s82, %s84
      %p91 = scmp.eq.s32.totalorder %s27, 1
      %p92 = por %p90, %p91
      %p93 = scmp.ne.s32.totalorder %s84, %s85
      %p94 = scmp.eq.s32.totalorder %s27, 0
      %p95 = por %p93, %p94
      %p96 = scmp.ne.s32.totalorder %s84, %s85
      %p97 = scmp.eq.s32.totalorder %s28, 1
      %p98 = por %p96, %p97
      %p100 = scmp.ne.s32.totalorder %s85, %s99
      %p101 = scmp.eq.s32.totalorder %s28, 0
      %p102 = por %p100, %p101
      %s104 = sadd.s32 %s103, 1
      %p107 = scmp.eq.s32.totalorder %s22, 1
      %p108 = scmp.ne.s32.totalorder %s103, %s105
      %p109 = scmp.eq.s32.totalorder %s22, 0
      %p110 = por %p108, %p109
      %p111 = scmp.ne.s32.totalorder %s103, %s105
      %p112 = scmp.eq.s32.totalorder %s27, 1
      %p113 = por %p111, %p112
      %p114 = scmp.ne.s32.totalorder %s105, %s106
      %p115 = scmp.eq.s32.totalorder %s27, 0
      %p116 = por %p114, %p115
      %p117 = scmp.ne.s32.totalorder %s105, %s106
      %p118 = scmp.eq.s32.totalorder %s28, 1
      %p119 = por %p117, %p118
      %p121 = scmp.ne.s32.totalorder %s106, %s120
      %p122 = scmp.eq.s32.totalorder %s28, 0
      %p123 = por %p121, %p122
      %s125 = sadd.s32 %s124, 1
      %p128 = scmp.eq.s32.totalorder %s22, 1
      %p129 = scmp.ne.s32.totalorder %s124, %s126
      %p130 = scmp.eq.s32.totalorder %s22, 0
      %p131 = por %p129, %p130
      %p132 = scmp.ne.s32.totalorder %s124, %s126
      %p133 = scmp.eq.s32.totalorder %s27, 1
      %p134 = por %p132, %p133
      %p135 = scmp.ne.s32.totalorder %s126, %s127
      %p136 = scmp.eq.s32.totalorder %s27, 0
      %p137 = por %p135, %p136
      %p138 = scmp.ne.s32.totalorder %s126, %s127
      %p139 = scmp.eq.s32.totalorder %s28, 1
      %p140 = por %p138, %p139
      %p142 = scmp.ne.s32.totalorder %s127, %s141
      %p143 = scmp.eq.s32.totalorder %s28, 0
      %p144 = por %p142, %p143
      %s146 = sadd.s32 %s145, 1
      %p149 = scmp.eq.s32.totalorder %s22, 1
      %p150 = scmp.ne.s32.totalorder %s145, %s147
      %p151 = scmp.eq.s32.totalorder %s22, 0
      %p152 = por %p150, %p151
      %p153 = scmp.ne.s32.totalorder %s145, %s147
      %p154 = scmp.eq.s32.totalorder %s27, 1
      %p155 = por %p153, %p154
      %p156 = scmp.ne.s32.totalorder %s147, %s148
      %p157 = scmp.eq.s32.totalorder %s27, 0
      %p158 = por %p156, %p157
      %p159 = scmp.ne.s32.totalorder %s147, %s148
      %p160 = scmp.eq.s32.totalorder %s28, 1
      %p161 = por %p159, %p160
      %p163 = scmp.ne.s32.totalorder %s148, %s162
      %p164 = scmp.eq.s32.totalorder %s28, 0
      %p165 = por %p163, %p164
      %s166 = ssub.s32 %s22, %s29
      %p167 = scmp.eq.s32.totalorder %s166, 0
      %s169 = sadd.s32 %s168, 1
      %s170 = scalar_select %p167, %s168, %s169
      %p173 = pneg %p167
      %p174 = scmp.eq.s32.totalorder %s22, 1
      %p175 = por %p173, %p174
      %p176 = scmp.ne.s32.totalorder %s168, %s171
      %p177 = scmp.eq.s32.totalorder %s22, 0
      %p178 = por %p176, %p177
      %p179 = scmp.ne.s32.totalorder %s168, %s171
      %p180 = scmp.eq.s32.totalorder %s27, 1
      %p181 = por %p179, %p180
      %p182 = scmp.ne.s32.totalorder %s171, %s172
      %p183 = scmp.eq.s32.totalorder %s27, 0
      %p184 = por %p182, %p183
      %p185 = scmp.ne.s32.totalorder %s171, %s172
      %p186 = scmp.eq.s32.totalorder %s28, 1
      %p187 = por %p185, %p186
      %p189 = scmp.ne.s32.totalorder %s172, %s188
      %p190 = scmp.eq.s32.totalorder %s28, 0
      %p191 = por %p189, %p190
      %p192 = scmp.le.s32.totalorder 1, %s22
      %p193 = scmp.lt.s32.totalorder %s22, 3
      %p194 = pnand %p192, %p193
      %p195 = pneg %p194
      // Predicated region
      $region9: #{_fused_forward.1} parent=5 // pred_check
        _
      $region10: #{_fused_forward.1} parent=5 // pred_check_branch
        %197 = sbr.rel (%p194) target = $region12
      $region11: #{_fused_forward.1} parent=5 // pred_region
        %s198 = ssub.s32 %s22, 1
        // Predicated region
        $region13: #{_fused_forward.1} parent=11 // pred_check
          %p199 = pneg %p95
        $region14: #{_fused_forward.1} parent=11 // pred_check_branch
          %201 = sbr.rel (%p199) target = $region16
        $region15: #{_fused_forward.1} parent=11 // pred_region
          %s203 = ssub.s32 2048, 2048
          %204 = vsyncadd [#allocation6], %s203
          %s205 = sshll.u32 [#allocation7], 4
          %s206 = int_to_ptr.vmem [resolvable:$true] %s205
          %211 = dma.hbm_to_vmem [thread:$0]  %s2, 2048, %s206, [#allocation6], 128, 128, 8
        $region16: #{_fused_forward.1} parent=11 // pred_fallthru
          _
        // Predicated region
        $region17: #{_fused_forward.1} parent=11 // pred_check
          %p212 = pneg %p116
        $region18: #{_fused_forward.1} parent=11 // pred_check_branch
          %214 = sbr.rel (%p212) target = $region20
        $region19: #{_fused_forward.1} parent=11 // pred_region
          %s216 = ssub.s32 2048, 2048
          %217 = vsyncadd [#allocation9], %s216
          %s218 = sshll.u32 [#allocation8], 4
          %s219 = int_to_ptr.vmem [resolvable:$true] %s218
          %224 = dma.hbm_to_vmem [thread:$0]  %s3, 2048, %s219, [#allocation9], 128, 128, 8
        $region20: #{_fused_forward.1} parent=11 // pred_fallthru
          _
        // Predicated region
        $region21: #{_fused_forward.1} parent=11 // pred_check
          %p225 = pneg %p137
        $region22: #{_fused_forward.1} parent=11 // pred_check_branch
          %227 = sbr.rel (%p225) target = $region24
        $region23: #{_fused_forward.1} parent=11 // pred_region
          %s229 = ssub.s32 2048, 2048
          %230 = vsyncadd [#allocation9], %s229
          %s231 = sshll.u32 [#allocation10], 4
          %s232 = int_to_ptr.vmem [resolvable:$true] %s231
          %237 = dma.hbm_to_vmem [thread:$0]  %s4, 2048, %s232, [#allocation9], 128, 128, 8
        $region24: #{_fused_forward.1} parent=11 // pred_fallthru
          _
        // Predicated region
        $region25: #{_fused_forward.1} parent=11 // pred_check
          %p238 = pneg %p158
        $region26: #{_fused_forward.1} parent=11 // pred_check_branch
          %240 = sbr.rel (%p238) target = $region28
        $region27: #{_fused_forward.1} parent=11 // pred_region
          _
        $region28: #{_fused_forward.1} parent=11 // pred_fallthru
          _
      $region12: #{_fused_forward.1} parent=5 // pred_fallthru
        _
      %p241 = scmp.lt.s32.totalorder %s22, 2
      // Predicated region
      $region29: #{_fused_forward.1} parent=5 // pred_check
        %p242 = pneg %p241
      $region30: #{_fused_forward.1} parent=5 // pred_check_branch
        %244 = sbr.rel (%p242) target = $region32
      $region31: #{_fused_forward.1} parent=5 // pred_region
        // Predicated region
        $region33: #{_fused_forward.1} parent=31 // pred_check
          %p245 = pneg %p42
        $region34: #{_fused_forward.1} parent=31 // pred_check_branch
          %247 = sbr.rel (%p245) target = $region36
        $region35: #{_fused_forward.1} parent=31 // pred_region
          %s248 = sand.u32 %s32, 1
          %s249 = scalar_lea.sflag [#allocation3], %s248
          %s250 = sand.u32 %s32, 1
          %s251 = smul.addr %s250, 8
          %s252 = scalar_lea.vmem [#allocation2], %s251
          %s254 = ssub.s32 128, 128
          %255 = vsyncadd %s249, %s254
          %s256 = smul.addr %s22, 128
          %s257 = scalar_lea.hbm %s0, %s256
          %s259 = sshll.u32 %s252, 4
          %s260 = int_to_ptr.vmem [resolvable:$true] %s259
          %262 = dma.hbm_to_vmem [thread:$0]  %s257, 128, %s260, %s249
        $region36: #{_fused_forward.1} parent=31 // pred_fallthru
          _
        // Predicated region
        $region37: #{_fused_forward.1} parent=31 // pred_check
          %p263 = pneg %p68
        $region38: #{_fused_forward.1} parent=31 // pred_check_branch
          %265 = sbr.rel (%p263) target = $region40
        $region39: #{_fused_forward.1} parent=31 // pred_region
          %s266 = sand.u32 %s22, 1
          %s267 = scalar_lea.sflag [#allocation6], %s266
          %s268 = sand.u32 %s58, 1
          %s269 = smul.addr %s268, 8
          %s270 = scalar_lea.vmem [#allocation5], %s269
          %s272 = ssub.s32 128, 128
          %273 = vsyncadd %s267, %s272
          %s274 = smul.addr %s22, 128
          %s275 = scalar_lea.hbm %s1, %s274
          %s277 = sshll.u32 %s270, 4
          %s278 = int_to_ptr.vmem [resolvable:$true] %s277
          %280 = dma.hbm_to_vmem [thread:$0]  %s275, 128, %s278, %s267
        $region40: #{_fused_forward.1} parent=31 // pred_fallthru
          _
      $region32: #{_fused_forward.1} parent=5 // pred_fallthru
        _
      %p281 = scmp.le.s32.totalorder 1, %s22
      %p282 = scmp.lt.s32.totalorder %s22, 3
      %p283 = pnand %p281, %p282
      %p284 = pneg %p283
      // Predicated region
      $region41: #{_fused_forward.1} parent=5 // pred_check
        _
      $region42: #{_fused_forward.1} parent=5 // pred_check_branch
        %286 = sbr.rel (%p283) target = $region44
      $region43: #{_fused_forward.1} parent=5 // pred_region
        %s287 = ssub.s32 %s22, 1
        %s288 = sand.u32 %s35, 1
        %s289 = scalar_lea.sflag [#allocation3], %s288
        %s290 = sand.u32 %s35, 1
        %s291 = smul.addr %s290, 8
        %s292 = scalar_lea.vmem [#allocation2], %s291
        // Predicated region
        $region45: #{_fused_forward.1} parent=43 // pred_check
          %p293 = pneg %p48
        $region46: #{_fused_forward.1} parent=43 // pred_check_branch
          %295 = sbr.rel (%p293) target = $region48
        $region47: #{_fused_forward.1} parent=43 // pred_region
          %296 = dma.done %s289, 128
        $region48: #{_fused_forward.1} parent=43 // pred_fallthru
          _
        %s297 = sand.u32 %s27, 1
        %s298 = scalar_lea.sflag [#allocation6], %s297
        %s299 = sand.u32 %s61, 1
        %s300 = smul.addr %s299, 8
        %s301 = scalar_lea.vmem [#allocation5], %s300
        // Predicated region
        $region49: #{_fused_forward.1} parent=43 // pred_check
          %p302 = pneg %p74
        $region50: #{_fused_forward.1} parent=43 // pred_check_branch
          %304 = sbr.rel (%p302) target = $region52
        $region51: #{_fused_forward.1} parent=43 // pred_region
          %305 = dma.done %s298, 128
        $region52: #{_fused_forward.1} parent=43 // pred_fallthru
          _
        // Predicated region
        $region53: #{_fused_forward.1} parent=43 // pred_check
          %p306 = pneg %p95
        $region54: #{_fused_forward.1} parent=43 // pred_check_branch
          %308 = sbr.rel (%p306) target = $region56
        $region55: #{_fused_forward.1} parent=43 // pred_region
          %309 = dma.done [#allocation6], 2048
        $region56: #{_fused_forward.1} parent=43 // pred_fallthru
          _
        // Predicated region
        $region57: #{_fused_forward.1} parent=43 // pred_check
          %p310 = pneg %p116
        $region58: #{_fused_forward.1} parent=43 // pred_check_branch
          %312 = sbr.rel (%p310) target = $region60
        $region59: #{_fused_forward.1} parent=43 // pred_region
          %313 = dma.done [#allocation9], 2048
        $region60: #{_fused_forward.1} parent=43 // pred_fallthru
          _
        // Predicated region
        $region61: #{_fused_forward.1} parent=43 // pred_check
          %p314 = pneg %p137
        $region62: #{_fused_forward.1} parent=43 // pred_check_branch
          %316 = sbr.rel (%p314) target = $region64
        $region63: #{_fused_forward.1} parent=43 // pred_region
          %317 = dma.done [#allocation9], 2048
        $region64: #{_fused_forward.1} parent=43 // pred_fallthru
          _
        %s318 = sand.u32 %s35, 1
        %s319 = scalar_lea.sflag [#allocation3], %s318
        %s320 = sand.u32 %s35, 1
        %s321 = smul.addr %s320, 8
        %s322 = scalar_lea.vmem [#allocation2], %s321
        %p323 = pneg %p48
        %p324 = pneg %p45
        %s325 = sand.u32 %s27, 1
        %s326 = scalar_lea.sflag [#allocation6], %s325
        %s327 = sand.u32 %s61, 1
        %s328 = smul.addr %s327, 8
        %s329 = scalar_lea.vmem [#allocation5], %s328
        %p330 = pneg %p74
        %p331 = pneg %p71
        %p332 = pneg %p95
        %p333 = pneg %p92
        %p334 = pneg %p116
        %p335 = pneg %p113
        %p336 = pneg %p137
        %p337 = pneg %p134
        %p338 = pneg %p158
        %p339 = pneg %p155
        %p340 = pneg %p184
        %p341 = pneg %p181
        %s342 = sand.u32 %s171, 1
        %s343 = scalar_lea.sflag [#allocation4], %s342
        %s344 = sand.u32 %s171, 1
        %s345 = smul.addr %s344, 8
        %s346 = scalar_lea.vmem [#allocation11], %s345
        %v347 = vld [vmem:[%s292] sm:$0xff]
        %v348 = vld [vmem:[%s301] sm:$0xff]
        %v349 = vld [vmem:[%s5] sm:$0xff]
        %v350 = vld [vmem:[#allocation7] sm:$0xff]
        %v351 = vld [vmem:[#allocation7 + $0x8] sm:$0xff]
        %v352 = vld [vmem:[#allocation7 + $0x10] sm:$0xff]
        %v353 = vld [vmem:[#allocation7 + $0x18] sm:$0xff]
        %v354 = vld [vmem:[#allocation7 + $0x20] sm:$0xff]
        %v355 = vld [vmem:[#allocation7 + $0x28] sm:$0xff]
        %v356 = vld [vmem:[#allocation7 + $0x30] sm:$0xff]
        %v357 = vld [vmem:[#allocation7 + $0x38] sm:$0xff]
        %v358 = vld [vmem:[#allocation7 + $0x40] sm:$0xff]
        %v359 = vld [vmem:[#allocation7 + $0x48] sm:$0xff]
        %v360 = vld [vmem:[#allocation7 + $0x50] sm:$0xff]
        %v361 = vld [vmem:[#allocation7 + $0x58] sm:$0xff]
        %v362 = vld [vmem:[#allocation7 + $0x60] sm:$0xff]
        %v363 = vld [vmem:[#allocation7 + $0x68] sm:$0xff]
        %v364 = vld [vmem:[#allocation7 + $0x70] sm:$0xff]
        %v365 = vld [vmem:[#allocation7 + $0x78] sm:$0xff]
        %v366 = vld [vmem:[#allocation8] sm:$0xff]
        %v367 = vld [vmem:[#allocation8 + $0x8] sm:$0xff]
        %v368 = vld [vmem:[#allocation8 + $0x10] sm:$0xff]
        %v369 = vld [vmem:[#allocation8 + $0x18] sm:$0xff]
        %v370 = vld [vmem:[#allocation8 + $0x20] sm:$0xff]
        %v371 = vld [vmem:[#allocation8 + $0x28] sm:$0xff]
        %v372 = vld [vmem:[#allocation8 + $0x30] sm:$0xff]
        %v373 = vld [vmem:[#allocation8 + $0x38] sm:$0xff]
        %v374 = vld [vmem:[#allocation8 + $0x40] sm:$0xff]
        %v375 = vld [vmem:[#allocation8 + $0x48] sm:$0xff]
        %v376 = vld [vmem:[#allocation8 + $0x50] sm:$0xff]
        %v377 = vld [vmem:[#allocation8 + $0x58] sm:$0xff]
        %v378 = vld [vmem:[#allocation8 + $0x60] sm:$0xff]
        %v379 = vld [vmem:[#allocation8 + $0x68] sm:$0xff]
        %v380 = vld [vmem:[#allocation8 + $0x70] sm:$0xff]
        %v381 = vld [vmem:[#allocation8 + $0x78] sm:$0xff]
        %382 = vmatprep.subr.mxu0 0.0
        %383 = vmatpush1.msra.mxu0 %v366
        %384 = vmatprep.subr.mxu0 0.0
        %385 = vmatpush1.msra.mxu0 %v367
        %386 = vmatprep.subr.mxu0 0.0
        %387 = vmatpush1.msra.mxu0 %v368
        %388 = vmatprep.subr.mxu0 0.0
        %389 = vmatpush1.msra.mxu0 %v369
        %390 = vmatprep.subr.mxu0 0.0
        %391 = vmatpush1.msra.mxu0 %v370
        %392 = vmatprep.subr.mxu0 0.0
        %393 = vmatpush1.msra.mxu0 %v371
        %394 = vmatprep.subr.mxu0 0.0
        %395 = vmatpush1.msra.mxu0 %v372
        %396 = vmatprep.subr.mxu0 0.0
        %397 = vmatpush1.msra.mxu0 %v373
        %398 = vmatprep.subr.mxu0 0.0
        %399 = vmatpush1.msra.mxu0 %v374
        %400 = vmatprep.subr.mxu0 0.0
        %401 = vmatpush1.msra.mxu0 %v375
        %402 = vmatprep.subr.mxu0 0.0
        %403 = vmatpush1.msra.mxu0 %v376
        %404 = vmatprep.subr.mxu0 0.0
        %405 = vmatpush1.msra.mxu0 %v377
        %406 = vmatprep.subr.mxu0 0.0
        %407 = vmatpush1.msra.mxu0 %v378
        %408 = vmatprep.subr.mxu0 0.0
        %409 = vmatpush1.msra.mxu0 %v379
        %410 = vmatprep.subr.mxu0 0.0
        %411 = vmatpush1.msra.mxu0 %v380
        %412 = vmatprep.subr.mxu0 0.0
        %413 = vmatpush1.msra.mxu0 %v381
        %414 = vmatprep.subr.mxu0 0.0
        %415 = vmatpush1.msra.mxu0 0.0
        %416 = vmatprep.subr.mxu0 0.0
        %417 = vmatpush1.msra.mxu0 0.0
        %418 = vmatprep.subr.mxu0 0.0
        %419 = vmatpush1.msra.mxu0 0.0
        %420 = vmatprep.subr.mxu0 0.0
        %421 = vmatpush1.msra.mxu0 0.0
        %422 = vmatprep.subr.mxu0 0.0
        %423 = vmatpush1.msra.mxu0 0.0
        %424 = vmatprep.subr.mxu0 0.0
        %425 = vmatpush1.msra.mxu0 0.0
        %426 = vmatprep.subr.mxu0 0.0
        %427 = vmatpush1.msra.mxu0 0.0
        %428 = vmatprep.subr.mxu0 0.0
        %429 = vmatpush1.msra.mxu0 0.0
        %430 = vmatprep.subr.mxu0 0.0
        %431 = vmatpush1.msra.mxu0 0.0
        %432 = vmatprep.subr.mxu0 0.0
        %433 = vmatpush1.msra.mxu0 0.0
        %434 = vmatprep.subr.mxu0 0.0
        %435 = vmatpush1.msra.mxu0 0.0
        %436 = vmatprep.subr.mxu0 0.0
        %437 = vmatpush1.msra.mxu0 0.0
        %438 = vmatprep.subr.mxu0 0.0
        %439 = vmatpush1.msra.mxu0 0.0
        %440 = vmatprep.subr.mxu0 0.0
        %441 = vmatpush1.msra.mxu0 0.0
        %442 = vmatprep.subr.mxu0 0.0
        %443 = vmatpush1.msra.mxu0 0.0
        %444 = vmatprep.subr.mxu0 0.0
        %445 = vmatpush1.msra.mxu0 0.0
        %446 = vmatprep.mubr.f32.mxu0 0.0
        %447 = vmatmul.mubr.f32.gmra.mrb[0].mxu0 %v348
        %v448 = vpop.f32.mrb[0].mxu0
        %v449 = vadd.f32 0.0, %v448
        %v450 = vpop.f32.mrb[0].mxu0
        %451 = vdwg.mxu0
        %452 = vmatprep.subr.mxu0 0.0
        %453 = vmatpush1.msra.mxu0 %v350
        %454 = vmatprep.subr.mxu0 0.0
        %455 = vmatpush1.msra.mxu0 %v351
        %456 = vmatprep.subr.mxu0 0.0
        %457 = vmatpush1.msra.mxu0 %v352
        %458 = vmatprep.subr.mxu0 0.0
        %459 = vmatpush1.msra.mxu0 %v353
        %460 = vmatprep.subr.mxu0 0.0
        %461 = vmatpush1.msra.mxu0 %v354
        %462 = vmatprep.subr.mxu0 0.0
        %463 = vmatpush1.msra.mxu0 %v355
        %464 = vmatprep.subr.mxu0 0.0
        %465 = vmatpush1.msra.mxu0 %v356
        %466 = vmatprep.subr.mxu0 0.0
        %467 = vmatpush1.msra.mxu0 %v357
        %468 = vmatprep.subr.mxu0 0.0
        %469 = vmatpush1.msra.mxu0 %v358
        %470 = vmatprep.subr.mxu0 0.0
        %471 = vmatpush1.msra.mxu0 %v359
        %472 = vmatprep.subr.mxu0 0.0
        %473 = vmatpush1.msra.mxu0 %v360
        %474 = vmatprep.subr.mxu0 0.0
        %475 = vmatpush1.msra.mxu0 %v361
        %476 = vmatprep.subr.mxu0 0.0
        %477 = vmatpush1.msra.mxu0 %v362
        %478 = vmatprep.subr.mxu0 0.0
        %479 = vmatpush1.msra.mxu0 %v363
        %480 = vmatprep.subr.mxu0 0.0
        %481 = vmatpush1.msra.mxu0 %v364
        %482 = vmatprep.subr.mxu0 0.0
        %483 = vmatpush1.msra.mxu0 %v365
        %484 = vmatprep.subr.mxu0 0.0
        %485 = vmatpush1.msra.mxu0 0.0
        %486 = vmatprep.subr.mxu0 0.0
        %487 = vmatpush1.msra.mxu0 0.0
        %488 = vmatprep.subr.mxu0 0.0
        %489 = vmatpush1.msra.mxu0 0.0
        %490 = vmatprep.subr.mxu0 0.0
        %491 = vmatpush1.msra.mxu0 0.0
        %492 = vmatprep.subr.mxu0 0.0
        %493 = vmatpush1.msra.mxu0 0.0
        %494 = vmatprep.subr.mxu0 0.0
        %495 = vmatpush1.msra.mxu0 0.0
        %496 = vmatprep.subr.mxu0 0.0
        %497 = vmatpush1.msra.mxu0 0.0
        %498 = vmatprep.subr.mxu0 0.0
        %499 = vmatpush1.msra.mxu0 0.0
        %500 = vmatprep.subr.mxu0 0.0
        %501 = vmatpush1.msra.mxu0 0.0
        %502 = vmatprep.subr.mxu0 0.0
        %503 = vmatpush1.msra.mxu0 0.0
        %504 = vmatprep.subr.mxu0 0.0
        %505 = vmatpush1.msra.mxu0 0.0
        %506 = vmatprep.subr.mxu0 0.0
        %507 = vmatpush1.msra.mxu0 0.0
        %508 = vmatprep.subr.mxu0 0.0
        %509 = vmatpush1.msra.mxu0 0.0
        %510 = vmatprep.subr.mxu0 0.0
        %511 = vmatpush1.msra.mxu0 0.0
        %512 = vmatprep.subr.mxu0 0.0
        %513 = vmatpush1.msra.mxu0 0.0
        %514 = vmatprep.subr.mxu0 0.0
        %515 = vmatpush1.msra.mxu0 0.0
        %516 = vmatprep.mubr.f32.mxu0 0.0
        %517 = vmatmul.mubr.f32.gmra.mrb[0].mxu0 %v347
        %v518 = vpop.f32.mrb[0].mxu0
        %v519 = vadd.f32 %v449, %v518
        %v520 = vpop.f32.mrb[0].mxu0
        %521 = vdwg.mxu0
        %v522 = vlaneseq
        %v523 = vshrl.u32 %v522, 7
        %v524 = vsub.s32 0, %v523
        %v525 = vrot.slane %v349, %v524
        %v526 = vadd.f32 %v519, %v525
        %v527 = vxor.u32 %v526, 2147483648
        %v528 = vmul.f32 %v527, 1.442695
        %v529 = vpow.pop %v528
        %v530 = vadd.f32 %v529, 1.0
        %v531 = vrcp.pop %v530
        %v532 = vmul.f32 1.0, %v531
        %v533 = vld [vmem:[#allocation10] sm:$0xff]
        %v534 = vld [vmem:[#allocation10 + $0x8] sm:$0xff]
        %v535 = vld [vmem:[#allocation10 + $0x10] sm:$0xff]
        %v536 = vld [vmem:[#allocation10 + $0x18] sm:$0xff]
        %v537 = vld [vmem:[#allocation10 + $0x20] sm:$0xff]
        %v538 = vld [vmem:[#allocation10 + $0x28] sm:$0xff]
        %v539 = vld [vmem:[#allocation10 + $0x30] sm:$0xff]
        %v540 = vld [vmem:[#allocation10 + $0x38] sm:$0xff]
        %v541 = vld [vmem:[#allocation10 + $0x40] sm:$0xff]
        %v542 = vld [vmem:[#allocation10 + $0x48] sm:$0xff]
        %v543 = vld [vmem:[#allocation10 + $0x50] sm:$0xff]
        %v544 = vld [vmem:[#allocation10 + $0x58] sm:$0xff]
        %v545 = vld [vmem:[#allocation10 + $0x60] sm:$0xff]
        %v546 = vld [vmem:[#allocation10 + $0x68] sm:$0xff]
        %v547 = vld [vmem:[#allocation10 + $0x70] sm:$0xff]
        %v548 = vld [vmem:[#allocation10 + $0x78] sm:$0xff]
        %v549 = vlaneseq
        %v550 = vshrl.u32 %v549, 7
        %v551 = vsub.s32 1, %v550
        %v552 = vrot.slane %v349, %v551
        %553 = vmatprep.subr.mxu0 0.0
        %554 = vmatpush1.msra.mxu0 %v533
        %555 = vmatprep.subr.mxu0 0.0
        %556 = vmatpush1.msra.mxu0 %v534
        %557 = vmatprep.subr.mxu0 0.0
        %558 = vmatpush1.msra.mxu0 %v535
        %559 = vmatprep.subr.mxu0 0.0
        %560 = vmatpush1.msra.mxu0 %v536
        %561 = vmatprep.subr.mxu0 0.0
        %562 = vmatpush1.msra.mxu0 %v537
        %563 = vmatprep.subr.mxu0 0.0
        %564 = vmatpush1.msra.mxu0 %v538
        %565 = vmatprep.subr.mxu0 0.0
        %566 = vmatpush1.msra.mxu0 %v539
        %567 = vmatprep.subr.mxu0 0.0
        %568 = vmatpush1.msra.mxu0 %v540
        %569 = vmatprep.subr.mxu0 0.0
        %570 = vmatpush1.msra.mxu0 %v541
        %571 = vmatprep.subr.mxu0 0.0
        %572 = vmatpush1.msra.mxu0 %v542
        %573 = vmatprep.subr.mxu0 0.0
        %574 = vmatpush1.msra.mxu0 %v543
        %575 = vmatprep.subr.mxu0 0.0
        %576 = vmatpush1.msra.mxu0 %v544
        %577 = vmatprep.subr.mxu0 0.0
        %578 = vmatpush1.msra.mxu0 %v545
        %579 = vmatprep.subr.mxu0 0.0
        %580 = vmatpush1.msra.mxu0 %v546
        %581 = vmatprep.subr.mxu0 0.0
        %582 = vmatpush1.msra.mxu0 %v547
        %583 = vmatprep.subr.mxu0 0.0
        %584 = vmatpush1.msra.mxu0 %v548
        %585 = vmatprep.subr.mxu0 0.0
        %586 = vmatpush1.msra.mxu0 0.0
        %587 = vmatprep.subr.mxu0 0.0
        %588 = vmatpush1.msra.mxu0 0.0
        %589 = vmatprep.subr.mxu0 0.0
        %590 = vmatpush1.msra.mxu0 0.0
        %591 = vmatprep.subr.mxu0 0.0
        %592 = vmatpush1.msra.mxu0 0.0
        %593 = vmatprep.subr.mxu0 0.0
        %594 = vmatpush1.msra.mxu0 0.0
        %595 = vmatprep.subr.mxu0 0.0
        %596 = vmatpush1.msra.mxu0 0.0
        %597 = vmatprep.subr.mxu0 0.0
        %598 = vmatpush1.msra.mxu0 0.0
        %599 = vmatprep.subr.mxu0 0.0
        %600 = vmatpush1.msra.mxu0 0.0
        %601 = vmatprep.subr.mxu0 0.0
        %602 = vmatpush1.msra.mxu0 0.0
        %603 = vmatprep.subr.mxu0 0.0
        %604 = vmatpush1.msra.mxu0 0.0
        %605 = vmatprep.subr.mxu0 0.0
        %606 = vmatpush1.msra.mxu0 0.0
        %607 = vmatprep.subr.mxu0 0.0
        %608 = vmatpush1.msra.mxu0 0.0
        %609 = vmatprep.subr.mxu0 0.0
        %610 = vmatpush1.msra.mxu0 0.0
        %611 = vmatprep.subr.mxu0 0.0
        %612 = vmatpush1.msra.mxu0 0.0
        %613 = vmatprep.subr.mxu0 0.0
        %614 = vmatpush1.msra.mxu0 0.0
        %615 = vmatprep.subr.mxu0 0.0
        %616 = vmatpush1.msra.mxu0 0.0
        %617 = vmatprep.mubr.f32.mxu0 0.0
        %618 = vmatmul.mubr.f32.gmra.mrb[0].mxu0 %v348
        %v619 = vpop.f32.mrb[0].mxu0
        %v620 = vadd.f32 %v552, %v619
        %v621 = vpop.f32.mrb[0].mxu0
        %622 = vdwg.mxu0
        %v623 = vsub.f32 %v620, %v347
        %v624 = vmul.f32 %v532, %v623
        %v625 = vadd.f32 %v347, %v624
        %626 = vadd.xlane.f32.xlu0 %v625
        %v627 = vpop.xlane.xlu0 %626
        %v628 = vmul.f32 %v627, 0.03125
        %v629 = vmul.f32 %v625, %v625
        %630 = vadd.xlane.f32.xlu0 %v629
        %v631 = vpop.xlane.xlu0 %630
        %v632 = vmul.f32 %v631, 0.03125
        %v633 = vmul.f32 %v628, %v628
        %v634 = vsub.f32 %v632, %v633
        %v635 = vadd.f32 %v634, 1e-05
        %v636 = vrsqrt.pop %v635
        %v637 = vlaneseq
        %v638 = vshrl.u32 %v637, 7
        %v639 = vsub.s32 2, %v638
        %v640 = vrot.slane %v349, %v639
        %v641 = vmul.f32 %v636, %v640
        %v642 = vsub.f32 %v625, %v628
        %v643 = vmul.f32 %v642, %v641
        %v644 = vlaneseq
        %v645 = vshrl.u32 %v644, 7
        %v646 = vsub.s32 3, %v645
        %v647 = vrot.slane %v349, %v646
        %v648 = vadd.f32 %v643, %v647
        %649 = vst [vmem:[%s346] sm:$0xff] %v648
        %s650 = sand.u32 %s171, 1
        %s651 = scalar_lea.sflag [#allocation4], %s650
        %s652 = sand.u32 %s171, 1
        %s653 = smul.addr %s652, 8
        %s654 = scalar_lea.vmem [#allocation11], %s653
        // Predicated region
        $region65: #{_fused_forward.1} parent=43 // pred_check
          %p655 = pneg %p181
        $region66: #{_fused_forward.1} parent=43 // pred_check_branch
          %657 = sbr.rel (%p655) target = $region68
        $region67: #{_fused_forward.1} parent=43 // pred_region
          %s659 = ssub.s32 128, 128
          %660 = vsyncadd %s651, %s659
          %s661 = smul.addr %s27, 128
          %s662 = scalar_lea.hbm %s6, %s661
          %s664 = sshll.u32 %s654, 4
          %s665 = int_to_ptr.vmem [resolvable:$true] %s664
          %667 = dma.vmem_to_hbm [thread:$0]  %s665, 128, %s662, %s651
        $region68: #{_fused_forward.1} parent=43 // pred_fallthru
          _
      $region44: #{_fused_forward.1} parent=5 // pred_fallthru
        _
      %p668 = scmp.le.s32.totalorder 2, %s22
      // Predicated region
      $region69: #{_fused_forward.1} parent=5 // pred_check
        %p669 = pneg %p668
      $region70: #{_fused_forward.1} parent=5 // pred_check_branch
        %671 = sbr.rel (%p669) target = $region72
      $region71: #{_fused_forward.1} parent=5 // pred_region
        %s672 = ssub.s32 %s22, 2
        // Predicated region
        $region73: #{_fused_forward.1} parent=71 // pred_check
          %p673 = pneg %p187
        $region74: #{_fused_forward.1} parent=71 // pred_check_branch
          %675 = sbr.rel (%p673) target = $region76
        $region75: #{_fused_forward.1} parent=71 // pred_region
          %s676 = sand.u32 %s172, 1
          %s677 = scalar_lea.sflag [#allocation4], %s676
          %s678 = sand.u32 %s172, 1
          %s679 = smul.addr %s678, 8
          %s680 = scalar_lea.vmem [#allocation11], %s679
          %681 = dma.done %s677, 128
        $region76: #{_fused_forward.1} parent=71 // pred_fallthru
          _
      $region72: #{_fused_forward.1} parent=5 // pred_fallthru
        _
    $region6: #{_fused_forward.1} parent=1 // loop_footer
      %s26 = sadd.s32 1, %s22
    $region7: #{_fused_forward.1} parent=1 // loop_footer_branch
      %21 = sbr.rel target = $region3
    $region8: #{_fused_forward.1} parent=1 // loop_exit
      _
    %682 = vsyncpa [#allocation3], 1
    %s683 = scalar_lea.sflag [#allocation3], 1
    %684 = vsyncpa %s683, 1
    %685 = vsyncpa [#allocation6], 1
    %s686 = scalar_lea.sflag [#allocation6], 1
    %687 = vsyncpa %s686, 1
    %688 = vsyncpa [#allocation9], 1
    %689 = vsyncpa [#allocation4], 1
    %s690 = scalar_lea.sflag [#allocation4], 1
    %691 = vsyncpa %s690, 1

</llo_original>
